<compile_context>
chip_gen: v7x
topology: tpu7x:2x2x1
jax: 0.10.0
libtpu: 0.0.40
codegen_flags: <defaults>
</compile_context>

<pallas_src>
import jax
import jax.numpy as jnp
from jax.experimental import pallas as pl
from jax.experimental.pallas import tpu as pltpu

LANE = 128


def _round_up(n, m):
    return (n + m - 1) // m * m


def _pad_last(x, target):
    pad = target - x.shape[-1]
    if pad > 0:
        x = jnp.pad(x, [(0, 0)] * (x.ndim - 1) + [(0, pad)])
    return x


# ----------------------------------------------------------------------------
# Pallas kernel: whole Final_classifer forward for one batch image
# ----------------------------------------------------------------------------
def _final_classifier_kernel(
    xp_ref, xl_ref, xh_ref, xf_ref,              # activations, channel-major (C, pixels)
    mT_ref,                                      # (HpWp_pad, THW_pad) bilinear interp matrix
    w2_ref, b2_ref,                              # conv2 (BN folded)
    w3ap_ref, w3al_ref, b3a_ref,                 # conv3 layer 1 (split over concat, BN folded)
    w3b_ref, b3b_ref,                            # conv3 layer 2 (BN folded)
    wp_ref, bp_ref, wh_ref, bh_ref, wf_ref, bf_ref,   # classifiers (with bias)
    op_ref, oh_ref, of_ref,                      # outputs, channel-major (cls, pixels)
):
    f32 = jnp.float32

    # bilinear (align_corners=True) upsample of xp, expressed as a pixel matmul.
    xt = jnp.dot(xp_ref[...], mT_ref[...], preferred_element_type=f32)      # (C, THW)

    # conv2 branch: 1x1 conv + folded BN + ReLU on xl.
    xl_c = jnp.maximum(
        jnp.dot(w2_ref[...], xl_ref[...], preferred_element_type=f32) + b2_ref[...],
        0.0)                                                                 # (48, THW)

    # conv3 layer 1 on concat([xt, xl_c]) -- concat avoided via split weights.
    h1 = jnp.dot(w3ap_ref[...], xt, preferred_element_type=f32)
    h1 = h1 + jnp.dot(w3al_ref[...], xl_c, preferred_element_type=f32)
    h1 = jnp.maximum(h1 + b3a_ref[...], 0.0)                                 # (C, THW)

    # conv3 layer 2.
    h2 = jnp.maximum(
        jnp.dot(w3b_ref[...], h1, preferred_element_type=f32) + b3b_ref[...],
        0.0)                                                                 # (C, THW)

    # classification heads (1x1 convs with bias).
    op_ref[...] = (jnp.dot(wp_ref[...], h2, preferred_element_type=f32)
                   + bp_ref[...]).astype(op_ref.dtype)
    oh_ref[...] = (jnp.dot(wh_ref[...], xh_ref[...], preferred_element_type=f32)
                   + bh_ref[...]).astype(oh_ref.dtype)
    of_ref[...] = (jnp.dot(wf_ref[...], xf_ref[...], preferred_element_type=f32)
                   + bf_ref[...]).astype(of_ref.dtype)


# ----------------------------------------------------------------------------
# Bilinear (align_corners=True) interpolation matrices
# ----------------------------------------------------------------------------
def _interp_matrix_1d(out_len, in_len):
    """R (out_len, in_len) with y = R @ x == 1-D linear interp, align_corners=True."""
    if out_len == 1:
        return jnp.zeros((1, in_len), jnp.float32).at[0, 0].set(1.0)
    scale = (in_len - 1) / (out_len - 1)
    src = jnp.arange(out_len, dtype=jnp.float32) * scale
    lo = jnp.clip(jnp.floor(src).astype(jnp.int32), 0, in_len - 1)
    hi = jnp.clip(lo + 1, 0, in_len - 1)
    w_hi = src - lo.astype(jnp.float32)
    w_lo = 1.0 - w_hi
    rows = jnp.arange(out_len)
    r = jnp.zeros((out_len, in_len), jnp.float32)
    r = r.at[rows, lo].add(w_lo)
    r = r.at[rows, hi].add(w_hi)
    return r


# ----------------------------------------------------------------------------
# Forward wrapper (jit'ed): layout glue + single pallas_call
# ----------------------------------------------------------------------------
def final_classifier_forward(params, xp, xh, xf, xl):
    N, C, Hp, Wp = xp.shape
    _, _, th, tw = xl.shape
    _, _, Hh, Wh = xh.shape
    _, _, Hf, Wf = xf.shape
    P_p, P_l, P_h, P_f = Hp * Wp, th * tw, Hh * Wh, Hf * Wf

    # pad pixel axes up to a lane multiple so every kernel store is lane-dense
    Pp_pad = _round_up(P_p, LANE)
    Pl_pad = _round_up(P_l, LANE)
    Ph_pad = _round_up(P_h, LANE)
    Pf_pad = _round_up(P_f, LANE)

    # free reshapes to channel-major pixel layout (no transposes), + lane pad
    xp_pix = _pad_last(xp.reshape(N, C, P_p), Pp_pad)
    xl_pix = _pad_last(xl.reshape(N, C, P_l), Pl_pad)
    xh_pix = _pad_last(xh.reshape(N, C, P_h), Ph_pad)
    xf_pix = _pad_last(xf.reshape(N, C, P_f), Pf_pad)

    # bilinear upsample xp -> xl spatial size, as a matmul on the pixel axis.
    # zero-padded rows/cols keep the padded lanes inert (constant-folded at trace).
    r_h = _interp_matrix_1d(th, Hp)
    r_w = _interp_matrix_1d(tw, Wp)
    mT = jnp.kron(r_h, r_w).T                                   # (P_p, P_l)
    mT = jnp.pad(mT, ((0, Pp_pad - P_p), (0, Pl_pad - P_l)))

    cls_p = params["wp"].shape[0]
    cls_h = params["wh"].shape[0]
    cls_f = params["wf"].shape[0]

    weight_args = (
        mT,
        params["w2"], params["b2"],
        params["w3ap"], params["w3al"], params["b3a"],
        params["w3b"], params["b3b"],
        params["wp"], params["bp"],
        params["wh"], params["bh"],
        params["wf"], params["bf"],
    )

    batch3 = lambda n: (n, 0, 0)          # per-image activation / output blocks
    full2 = lambda n: (0, 0)              # weights: same (whole) block every step -> DMA once
    weight_specs = [pl.BlockSpec(w.shape, full2) for w in weight_args]

    out_p, out_h, out_f = pl.pallas_call(
        _final_classifier_kernel,
        out_shape=(
            jax.ShapeDtypeStruct((N, cls_p, Pl_pad), xp.dtype),
            jax.ShapeDtypeStruct((N, cls_h, Ph_pad), xh.dtype),
            jax.ShapeDtypeStruct((N, cls_f, Pf_pad), xf.dtype),
        ),
        grid_spec=pl.GridSpec(
            grid=(N,),
            in_specs=[
                pl.BlockSpec((pl.Squeezed(), C, Pp_pad), batch3),   # xp
                pl.BlockSpec((pl.Squeezed(), C, Pl_pad), batch3),   # xl
                pl.BlockSpec((pl.Squeezed(), C, Ph_pad), batch3),   # xh
                pl.BlockSpec((pl.Squeezed(), C, Pf_pad), batch3),   # xf
                *weight_specs,
            ],
            out_specs=[
                pl.BlockSpec((pl.Squeezed(), cls_p, Pl_pad), batch3),
                pl.BlockSpec((pl.Squeezed(), cls_h, Ph_pad), batch3),
                pl.BlockSpec((pl.Squeezed(), cls_f, Pf_pad), batch3),
            ],
        ),
        compiler_params=pltpu.CompilerParams(
            # batch axis is independent work -> lets v7x shard it over its 2 TCs
            dimension_semantics=("parallel",),
        ),
    )(xp_pix, xl_pix, xh_pix, xf_pix, *weight_args)

    return (out_p[:, :, :P_l].reshape(N, cls_p, th, tw),
            out_h[:, :, :P_h].reshape(N, cls_h, Hh, Wh),
            out_f[:, :, :P_f].reshape(N, cls_f, Hf, Wf))


# ----------------------------------------------------------------------------
# Parameter construction + BN folding
# ----------------------------------------------------------------------------
def make_raw_params(key, in_dim=64, cls_p=7, cls_h=3, cls_f=2):
    ks = iter(jax.random.split(key, 32))

    def nrm(shape, scale=0.05):
        return scale * jax.random.normal(next(ks), shape, jnp.float32)

    def bn(c):
        g = 1.0 + 0.1 * jax.random.normal(next(ks), (c,), jnp.float32)
        b = 0.1 * jax.random.normal(next(ks), (c,), jnp.float32)
        m = 0.1 * jax.random.normal(next(ks), (c,), jnp.float32)
        v = jnp.abs(jax.random.normal(next(ks), (c,), jnp.float32)) + 0.5
        return (g, b, m, v)

    return dict(
        w2=nrm((48, in_dim)), bn2=bn(48),                       # conv2: in->48, BN
        w3a=nrm((in_dim, in_dim + 48)), bn3a=bn(in_dim),        # conv3 layer 1, BN
        w3b=nrm((in_dim, in_dim)), bn3b=bn(in_dim),             # conv3 layer 2, BN
        wp=nrm((cls_p, in_dim)), bp=nrm((cls_p,), 0.1),         # p_cls (bias=True)
        wh=nrm((cls_h, in_dim)), bh=nrm((cls_h,), 0.1),         # h_cls (bias=True)
        wf=nrm((cls_f, in_dim)), bf=nrm((cls_f,), 0.1),         # f_cls (bias=True)
    )


def fold_params(raw, eps=1e-5):
    """Fold inference-mode BN (scale) into the conv weights; keep biases as (C,1)."""
    def fold(w, bn_params):
        g, b, m, v = bn_params
        s = g / jnp.sqrt(v + eps)
        return w * s[:, None], (b - m * s)[:, None]

    w2, b2 = fold(raw["w2"], raw["bn2"])
    w3a, b3a = fold(raw["w3a"], raw["bn3a"])
    w3b, b3b = fold(raw["w3b"], raw["bn3b"])
    c_in = raw["w3b"].shape[0]
    return dict(
        w2=w2, b2=b2,
        w3ap=w3a[:, :c_in], w3al=w3a[:, c_in:], b3a=b3a,   # split over concat([xt, xl'])
        w3b=w3b, b3b=b3b,
        wp=raw["wp"], bp=raw["bp"][:, None],
        wh=raw["wh"], bh=raw["bh"][:, None],
        wf=raw["wf"], bf=raw["bf"][:, None],
    )


class FinalClassifierPallas:
    def __init__(self, raw_params, eps=1e-5):
        self.params = fold_params(raw_params, eps=eps)
        self._fwd = jax.jit(final_classifier_forward)

    def __call__(self, xp, xh, xf, xl):
        return self._fwd(self.params, xp, xh, xf, xl)


# ----------------------------------------------------------------------------
# Plain-JAX reference (uses the raw, un-folded parameters)
# ----------------------------------------------------------------------------
def _conv1x1_ref(x, w):
    return jnp.einsum("oc,nchw->nohw", w, x)


def _bn_ref(x, bn_params, eps=1e-5):
    g, b, m, v = bn_params
    s = g / jnp.sqrt(v + eps)
    return x * s[None, :, None, None] + (b - m * s)[None, :, None, None]


def final_classifier_ref(raw, xp, xh, xf, xl, eps=1e-5):
    th, tw = xl.shape[2], xl.shape[3]
    r_h = _interp_matrix_1d(th, xp.shape[2])
    r_w = _interp_matrix_1d(tw, xp.shape[3])
    xt = jnp.einsum("ha,wb,ncab->nchw", r_h, r_w, xp)
    xl_c = jax.nn.relu(_bn_ref(_conv1x1_ref(xl, raw["w2"]), raw["bn2"], eps))
    x = jnp.concatenate([xt, xl_c], axis=1)
    h1 = jax.nn.relu(_bn_ref(_conv1x1_ref(x, raw["w3a"]), raw["bn3a"], eps))
    h2 = jax.nn.relu(_bn_ref(_conv1x1_ref(h1, raw["w3b"]), raw["bn3b"], eps))
    xp_seg = _conv1x1_ref(h2, raw["wp"]) + raw["bp"][None, :, None, None]
    xh_seg = _conv1x1_ref(xh, raw["wh"]) + raw["bh"][None, :, None, None]
    xf_seg = _conv1x1_ref(xf, raw["wf"]) + raw["bf"][None, :, None, None]
    return xp_seg, xh_seg, xf_seg


if __name__ == "__main__":
    # Small shapes consistent with the module: batch=2, in_dim=64,
    # low-res xp = 8x8 upsampled to xl's 16x16; xh/xf at 16x16.
    N, C = 2, 64
    HP, WP = 8, 8
    TH, TW = 16, 16
    HH, WH = 16, 16
    HF, WF = 16, 16
    CLS_P, CLS_H, CLS_F = 7, 3, 2

    key = jax.random.PRNGKey(0)
    kxp, kxh, kxf, kxl, kparam = jax.random.split(key, 5)
    xp = jax.random.normal(kxp, (N, C, HP, WP), jnp.float32)
    xh = jax.random.normal(kxh, (N, C, HH, WH), jnp.float32)
    xf = jax.random.normal(kxf, (N, C, HF, WF), jnp.float32)
    xl = jax.random.normal(kxl, (N, C, TH, TW), jnp.float32)

    raw = make_raw_params(kparam, in_dim=C, cls_p=CLS_P, cls_h=CLS_H, cls_f=CLS_F)
    model = FinalClassifierPallas(raw)

    yp, yh, yf = model(xp, xh, xf, xl)
    jax.block_until_ready((yp, yh, yf))

    rp, rh, rf = final_classifier_ref(raw, xp, xh, xf, xl)
    assert yp.shape == (N, CLS_P, TH, TW)
    assert yh.shape == (N, CLS_H, HH, WH)
    assert yf.shape == (N, CLS_F, HF, WF)
    assert jnp.allclose(yp, rp, atol=2e-3, rtol=2e-3)
    assert jnp.allclose(yh, rh, atol=2e-3, rtol=2e-3)
    assert jnp.allclose(yf, rf, atol=2e-3, rtol=2e-3)

    print("KERNEL_OK")
</pallas_src>

<mosaic_0001>
module attributes {stable_mosaic.version = 11 : i64} {
  func.func private @main(%arg0: i32) attributes {dimension_semantics = [#tpu.dimension_semantics<core_parallel>], iteration_bounds = array<i64: 2>, tpu.core_type = #tpu.core_type<sc_scalar_subcore>, window_params = []} {
    return
  }
}

module attributes {stable_mosaic.version = 11 : i64} {
  func.func private @main(%arg0: i32) attributes {dimension_semantics = [#tpu.dimension_semantics<core_parallel>], iteration_bounds = array<i64: 2>, tpu.core_type = #tpu.core_type<sc_scalar_subcore>, window_params = []} {
    return
  }
}

module attributes {stable_mosaic.version = 11 : i64} {
  func.func @_final_classifier_kernel(%arg0: i32, %arg1: memref<1x64x128xf32, #tpu.memory_space<vmem>>, %arg2: memref<1x64x256xf32, #tpu.memory_space<vmem>>, %arg3: memref<1x64x256xf32, #tpu.memory_space<vmem>>, %arg4: memref<1x64x256xf32, #tpu.memory_space<vmem>>, %arg5: memref<128x256xf32, #tpu.memory_space<vmem>>, %arg6: memref<48x64xf32, #tpu.memory_space<vmem>>, %arg7: memref<48x1xf32, #tpu.memory_space<vmem>>, %arg8: memref<64x64xf32, #tpu.memory_space<vmem>>, %arg9: memref<64x48xf32, #tpu.memory_space<vmem>>, %arg10: memref<64x1xf32, #tpu.memory_space<vmem>>, %arg11: memref<64x64xf32, #tpu.memory_space<vmem>>, %arg12: memref<64x1xf32, #tpu.memory_space<vmem>>, %arg13: memref<7x64xf32, #tpu.memory_space<vmem>>, %arg14: memref<7x1xf32, #tpu.memory_space<vmem>>, %arg15: memref<3x64xf32, #tpu.memory_space<vmem>>, %arg16: memref<3x1xf32, #tpu.memory_space<vmem>>, %arg17: memref<2x64xf32, #tpu.memory_space<vmem>>, %arg18: memref<2x1xf32, #tpu.memory_space<vmem>>, %arg19: memref<1x7x256xf32, #tpu.memory_space<vmem>>, %arg20: memref<1x3x256xf32, #tpu.memory_space<vmem>>, %arg21: memref<1x2x256xf32, #tpu.memory_space<vmem>>) attributes {dimension_semantics = [#tpu.dimension_semantics<parallel>], iteration_bounds = array<i64: 2>, scalar_prefetch = 0 : i64, scratch_operands = 0 : i64, tpu.core_type = #tpu.core_type<tc>, window_params = [{transform_indices = @transform_0, window_bounds = array<i64: 1, 64, 128>}, {transform_indices = @transform_1, window_bounds = array<i64: 1, 64, 256>}, {transform_indices = @transform_2, window_bounds = array<i64: 1, 64, 256>}, {transform_indices = @transform_3, window_bounds = array<i64: 1, 64, 256>}, {pipeline_mode = #tpu.pipeline_mode<synchronous>, transform_indices = @transform_4, window_bounds = array<i64: 128, 256>}, {pipeline_mode = #tpu.pipeline_mode<synchronous>, transform_indices = @transform_5, window_bounds = array<i64: 48, 64>}, {pipeline_mode = #tpu.pipeline_mode<synchronous>, transform_indices = @transform_6, window_bounds = array<i64: 48, 1>}, {pipeline_mode = #tpu.pipeline_mode<synchronous>, transform_indices = @transform_7, window_bounds = array<i64: 64, 64>}, {pipeline_mode = #tpu.pipeline_mode<synchronous>, transform_indices = @transform_8, window_bounds = array<i64: 64, 48>}, {pipeline_mode = #tpu.pipeline_mode<synchronous>, transform_indices = @transform_9, window_bounds = array<i64: 64, 1>}, {pipeline_mode = #tpu.pipeline_mode<synchronous>, transform_indices = @transform_10, window_bounds = array<i64: 64, 64>}, {pipeline_mode = #tpu.pipeline_mode<synchronous>, transform_indices = @transform_11, window_bounds = array<i64: 64, 1>}, {pipeline_mode = #tpu.pipeline_mode<synchronous>, transform_indices = @transform_12, window_bounds = array<i64: 7, 64>}, {pipeline_mode = #tpu.pipeline_mode<synchronous>, transform_indices = @transform_13, window_bounds = array<i64: 7, 1>}, {pipeline_mode = #tpu.pipeline_mode<synchronous>, transform_indices = @transform_14, window_bounds = array<i64: 3, 64>}, {pipeline_mode = #tpu.pipeline_mode<synchronous>, transform_indices = @transform_15, window_bounds = array<i64: 3, 1>}, {pipeline_mode = #tpu.pipeline_mode<synchronous>, transform_indices = @transform_16, window_bounds = array<i64: 2, 64>}, {pipeline_mode = #tpu.pipeline_mode<synchronous>, transform_indices = @transform_17, window_bounds = array<i64: 2, 1>}, {transform_indices = @transform_18, window_bounds = array<i64: 1, 7, 256>}, {transform_indices = @transform_19, window_bounds = array<i64: 1, 3, 256>}, {transform_indices = @transform_20, window_bounds = array<i64: 1, 2, 256>}]} {
    %c0 = arith.constant 0 : index
    %c0_0 = arith.constant 0 : index
    %c0_1 = arith.constant 0 : index
    %0 = vector.load %arg1[%c0, %c0_0, %c0_1] : memref<1x64x128xf32, #tpu.memory_space<vmem>>, vector<1x64x128xf32>
    %1 = vector.shape_cast %0 : vector<1x64x128xf32> to vector<64x128xf32>
    %c0_2 = arith.constant 0 : index
    %c0_3 = arith.constant 0 : index
    %2 = vector.load %arg5[%c0_2, %c0_3] : memref<128x256xf32, #tpu.memory_space<vmem>>, vector<128x256xf32>
    %cst = arith.constant dense<0.000000e+00> : vector<64x256xf32>
    %3 = tpu.matmul %1, %2, %cst {dimension_numbers = #tpu.dot_dimension_numbers<[1], [0], [0], [1], [0, 0, 1, 1], [], []>} : vector<64x128xf32>, vector<128x256xf32>, vector<64x256xf32> -> vector<64x256xf32>
    %c0_4 = arith.constant 0 : index
    %c0_5 = arith.constant 0 : index
    %4 = vector.load %arg6[%c0_4, %c0_5] : memref<48x64xf32, #tpu.memory_space<vmem>>, vector<48x64xf32>
    %c0_6 = arith.constant 0 : index
    %c0_7 = arith.constant 0 : index
    %c0_8 = arith.constant 0 : index
    %5 = vector.load %arg2[%c0_6, %c0_7, %c0_8] : memref<1x64x256xf32, #tpu.memory_space<vmem>>, vector<1x64x256xf32>
    %6 = vector.shape_cast %5 : vector<1x64x256xf32> to vector<64x256xf32>
    %cst_9 = arith.constant dense<0.000000e+00> : vector<48x256xf32>
    %7 = tpu.matmul %4, %6, %cst_9 {dimension_numbers = #tpu.dot_dimension_numbers<[1], [0], [0], [1], [0, 0, 1, 1], [], []>} : vector<48x64xf32>, vector<64x256xf32>, vector<48x256xf32> -> vector<48x256xf32>
    %c0_10 = arith.constant 0 : index
    %c0_11 = arith.constant 0 : index
    %8 = vector.load %arg7[%c0_10, %c0_11] : memref<48x1xf32, #tpu.memory_space<vmem>>, vector<48x1xf32>
    %9 = vector.broadcast %8 : vector<48x1xf32> to vector<48x256xf32>
    %10 = arith.addf %7, %9 : vector<48x256xf32>
    %cst_12 = arith.constant 0.000000e+00 : f32
    %11 = vector.broadcast %cst_12 : f32 to vector<48x256xf32>
    %12 = arith.maximumf %10, %11 : vector<48x256xf32>
    %c0_13 = arith.constant 0 : index
    %c0_14 = arith.constant 0 : index
    %13 = vector.load %arg8[%c0_13, %c0_14] : memref<64x64xf32, #tpu.memory_space<vmem>>, vector<64x64xf32>
    %cst_15 = arith.constant dense<0.000000e+00> : vector<64x256xf32>
    %14 = tpu.matmul %13, %3, %cst_15 {dimension_numbers = #tpu.dot_dimension_numbers<[1], [0], [0], [1], [0, 0, 1, 1], [], []>} : vector<64x64xf32>, vector<64x256xf32>, vector<64x256xf32> -> vector<64x256xf32>
    %c0_16 = arith.constant 0 : index
    %c0_17 = arith.constant 0 : index
    %15 = vector.load %arg9[%c0_16, %c0_17] : memref<64x48xf32, #tpu.memory_space<vmem>>, vector<64x48xf32>
    %cst_18 = arith.constant dense<0.000000e+00> : vector<64x256xf32>
    %16 = tpu.matmul %15, %12, %cst_18 {dimension_numbers = #tpu.dot_dimension_numbers<[1], [0], [0], [1], [0, 0, 1, 1], [], []>} : vector<64x48xf32>, vector<48x256xf32>, vector<64x256xf32> -> vector<64x256xf32>
    %17 = arith.addf %14, %16 : vector<64x256xf32>
    %c0_19 = arith.constant 0 : index
    %c0_20 = arith.constant 0 : index
    %18 = vector.load %arg10[%c0_19, %c0_20] : memref<64x1xf32, #tpu.memory_space<vmem>>, vector<64x1xf32>
    %19 = vector.broadcast %18 : vector<64x1xf32> to vector<64x256xf32>
    %20 = arith.addf %17, %19 : vector<64x256xf32>
    %cst_21 = arith.constant 0.000000e+00 : f32
    %21 = vector.broadcast %cst_21 : f32 to vector<64x256xf32>
    %22 = arith.maximumf %20, %21 : vector<64x256xf32>
    %c0_22 = arith.constant 0 : index
    %c0_23 = arith.constant 0 : index
    %23 = vector.load %arg11[%c0_22, %c0_23] : memref<64x64xf32, #tpu.memory_space<vmem>>, vector<64x64xf32>
    %cst_24 = arith.constant dense<0.000000e+00> : vector<64x256xf32>
    %24 = tpu.matmul %23, %22, %cst_24 {dimension_numbers = #tpu.dot_dimension_numbers<[1], [0], [0], [1], [0, 0, 1, 1], [], []>} : vector<64x64xf32>, vector<64x256xf32>, vector<64x256xf32> -> vector<64x256xf32>
    %c0_25 = arith.constant 0 : index
    %c0_26 = arith.constant 0 : index
    %25 = vector.load %arg12[%c0_25, %c0_26] : memref<64x1xf32, #tpu.memory_space<vmem>>, vector<64x1xf32>
    %26 = vector.broadcast %25 : vector<64x1xf32> to vector<64x256xf32>
    %27 = arith.addf %24, %26 : vector<64x256xf32>
    %cst_27 = arith.constant 0.000000e+00 : f32
    %28 = vector.broadcast %cst_27 : f32 to vector<64x256xf32>
    %29 = arith.maximumf %27, %28 : vector<64x256xf32>
    %c0_28 = arith.constant 0 : index
    %c0_29 = arith.constant 0 : index
    %30 = vector.load %arg13[%c0_28, %c0_29] : memref<7x64xf32, #tpu.memory_space<vmem>>, vector<7x64xf32>
    %cst_30 = arith.constant dense<0.000000e+00> : vector<7x256xf32>
    %31 = tpu.matmul %30, %29, %cst_30 {dimension_numbers = #tpu.dot_dimension_numbers<[1], [0], [0], [1], [0, 0, 1, 1], [], []>} : vector<7x64xf32>, vector<64x256xf32>, vector<7x256xf32> -> vector<7x256xf32>
    %c0_31 = arith.constant 0 : index
    %c0_32 = arith.constant 0 : index
    %32 = vector.load %arg14[%c0_31, %c0_32] : memref<7x1xf32, #tpu.memory_space<vmem>>, vector<7x1xf32>
    %33 = vector.broadcast %32 : vector<7x1xf32> to vector<7x256xf32>
    %34 = arith.addf %31, %33 : vector<7x256xf32>
    %c0_33 = arith.constant 0 : index
    %c0_34 = arith.constant 0 : index
    %c0_35 = arith.constant 0 : index
    %35 = vector.load %arg19[%c0_33, %c0_34, %c0_35] : memref<1x7x256xf32, #tpu.memory_space<vmem>>, vector<1x7x256xf32>
    %36 = vector.shape_cast %35 : vector<1x7x256xf32> to vector<7x256xf32>
    %37 = vector.shape_cast %34 : vector<7x256xf32> to vector<1x7x256xf32>
    tpu.vector_store %arg19[%c0_33, %c0_34, %c0_35], %37 {strides = array<i32>} : memref<1x7x256xf32, #tpu.memory_space<vmem>>, vector<1x7x256xf32>,
    %c0_36 = arith.constant 0 : index
    %c0_37 = arith.constant 0 : index
    %38 = vector.load %arg15[%c0_36, %c0_37] : memref<3x64xf32, #tpu.memory_space<vmem>>, vector<3x64xf32>
    %c0_38 = arith.constant 0 : index
    %c0_39 = arith.constant 0 : index
    %c0_40 = arith.constant 0 : index
    %39 = vector.load %arg3[%c0_38, %c0_39, %c0_40] : memref<1x64x256xf32, #tpu.memory_space<vmem>>, vector<1x64x256xf32>
    %40 = vector.shape_cast %39 : vector<1x64x256xf32> to vector<64x256xf32>
    %cst_41 = arith.constant dense<0.000000e+00> : vector<3x256xf32>
    %41 = tpu.matmul %38, %40, %cst_41 {dimension_numbers = #tpu.dot_dimension_numbers<[1], [0], [0], [1], [0, 0, 1, 1], [], []>} : vector<3x64xf32>, vector<64x256xf32>, vector<3x256xf32> -> vector<3x256xf32>
    %c0_42 = arith.constant 0 : index
    %c0_43 = arith.constant 0 : index
    %42 = vector.load %arg16[%c0_42, %c0_43] : memref<3x1xf32, #tpu.memory_space<vmem>>, vector<3x1xf32>
    %43 = vector.broadcast %42 : vector<3x1xf32> to vector<3x256xf32>
    %44 = arith.addf %41, %43 : vector<3x256xf32>
    %c0_44 = arith.constant 0 : index
    %c0_45 = arith.constant 0 : index
    %c0_46 = arith.constant 0 : index
    %45 = vector.load %arg20[%c0_44, %c0_45, %c0_46] : memref<1x3x256xf32, #tpu.memory_space<vmem>>, vector<1x3x256xf32>
    %46 = vector.shape_cast %45 : vector<1x3x256xf32> to vector<3x256xf32>
    %47 = vector.shape_cast %44 : vector<3x256xf32> to vector<1x3x256xf32>
    tpu.vector_store %arg20[%c0_44, %c0_45, %c0_46], %47 {strides = array<i32>} : memref<1x3x256xf32, #tpu.memory_space<vmem>>, vector<1x3x256xf32>,
    %c0_47 = arith.constant 0 : index
    %c0_48 = arith.constant 0 : index
    %48 = vector.load %arg17[%c0_47, %c0_48] : memref<2x64xf32, #tpu.memory_space<vmem>>, vector<2x64xf32>
    %c0_49 = arith.constant 0 : index
    %c0_50 = arith.constant 0 : index
    %c0_51 = arith.constant 0 : index
    %49 = vector.load %arg4[%c0_49, %c0_50, %c0_51] : memref<1x64x256xf32, #tpu.memory_space<vmem>>, vector<1x64x256xf32>
    %50 = vector.shape_cast %49 : vector<1x64x256xf32> to vector<64x256xf32>
    %cst_52 = arith.constant dense<0.000000e+00> : vector<2x256xf32>
    %51 = tpu.matmul %48, %50, %cst_52 {dimension_numbers = #tpu.dot_dimension_numbers<[1], [0], [0], [1], [0, 0, 1, 1], [], []>} : vector<2x64xf32>, vector<64x256xf32>, vector<2x256xf32> -> vector<2x256xf32>
    %c0_53 = arith.constant 0 : index
    %c0_54 = arith.constant 0 : index
    %52 = vector.load %arg18[%c0_53, %c0_54] : memref<2x1xf32, #tpu.memory_space<vmem>>, vector<2x1xf32>
    %53 = vector.broadcast %52 : vector<2x1xf32> to vector<2x256xf32>
    %54 = arith.addf %51, %53 : vector<2x256xf32>
    %c0_55 = arith.constant 0 : index
    %c0_56 = arith.constant 0 : index
    %c0_57 = arith.constant 0 : index
    %55 = vector.load %arg21[%c0_55, %c0_56, %c0_57] : memref<1x2x256xf32, #tpu.memory_space<vmem>>, vector<1x2x256xf32>
    %56 = vector.shape_cast %55 : vector<1x2x256xf32> to vector<2x256xf32>
    %57 = vector.shape_cast %54 : vector<2x256xf32> to vector<1x2x256xf32>
    tpu.vector_store %arg21[%c0_55, %c0_56, %c0_57], %57 {strides = array<i32>} : memref<1x2x256xf32, #tpu.memory_space<vmem>>, vector<1x2x256xf32>,
    return
  }
  func.func @transform_0(%arg0: i32) -> (i32, i32, i32) {
    %c0_i32 = arith.constant 0 : i32
    %c0_i32_0 = arith.constant 0 : i32
    %c0_i32_1 = arith.constant 0 : i32
    return %arg0, %c0_i32, %c0_i32_0 : i32, i32, i32
  }
  func.func @transform_1(%arg0: i32) -> (i32, i32, i32) {
    %c0_i32 = arith.constant 0 : i32
    %c0_i32_0 = arith.constant 0 : i32
    %c0_i32_1 = arith.constant 0 : i32
    return %arg0, %c0_i32, %c0_i32_0 : i32, i32, i32
  }
  func.func @transform_2(%arg0: i32) -> (i32, i32, i32) {
    %c0_i32 = arith.constant 0 : i32
    %c0_i32_0 = arith.constant 0 : i32
    %c0_i32_1 = arith.constant 0 : i32
    return %arg0, %c0_i32, %c0_i32_0 : i32, i32, i32
  }
  func.func @transform_3(%arg0: i32) -> (i32, i32, i32) {
    %c0_i32 = arith.constant 0 : i32
    %c0_i32_0 = arith.constant 0 : i32
    %c0_i32_1 = arith.constant 0 : i32
    return %arg0, %c0_i32, %c0_i32_0 : i32, i32, i32
  }
  func.func @transform_4(%arg0: i32) -> (i32, i32) {
    %c0_i32 = arith.constant 0 : i32
    %c0_i32_0 = arith.constant 0 : i32
    %c0_i32_1 = arith.constant 0 : i32
    return %c0_i32, %c0_i32_0 : i32, i32
  }
  func.func @transform_5(%arg0: i32) -> (i32, i32) {
    %c0_i32 = arith.constant 0 : i32
    %c0_i32_0 = arith.constant 0 : i32
    %c0_i32_1 = arith.constant 0 : i32
    return %c0_i32, %c0_i32_0 : i32, i32
  }
  func.func @transform_6(%arg0: i32) -> (i32, i32) {
    %c0_i32 = arith.constant 0 : i32
    %c0_i32_0 = arith.constant 0 : i32
    %c0_i32_1 = arith.constant 0 : i32
    return %c0_i32, %c0_i32_0 : i32, i32
  }
  func.func @transform_7(%arg0: i32) -> (i32, i32) {
    %c0_i32 = arith.constant 0 : i32
    %c0_i32_0 = arith.constant 0 : i32
    %c0_i32_1 = arith.constant 0 : i32
    return %c0_i32, %c0_i32_0 : i32, i32
  }
  func.func @transform_8(%arg0: i32) -> (i32, i32) {
    %c0_i32 = arith.constant 0 : i32
    %c0_i32_0 = arith.constant 0 : i32
    %c0_i32_1 = arith.constant 0 : i32
    return %c0_i32, %c0_i32_0 : i32, i32
  }
  func.func @transform_9(%arg0: i32) -> (i32, i32) {
    %c0_i32 = arith.constant 0 : i32
    %c0_i32_0 = arith.constant 0 : i32
    %c0_i32_1 = arith.constant 0 : i32
    return %c0_i32, %c0_i32_0 : i32, i32
  }
  func.func @transform_10(%arg0: i32) -> (i32, i32) {
    %c0_i32 = arith.constant 0 : i32
    %c0_i32_0 = arith.constant 0 : i32
    %c0_i32_1 = arith.constant 0 : i32
    return %c0_i32, %c0_i32_0 : i32, i32
  }
  func.func @transform_11(%arg0: i32) -> (i32, i32) {
    %c0_i32 = arith.constant 0 : i32
    %c0_i32_0 = arith.constant 0 : i32
    %c0_i32_1 = arith.constant 0 : i32
    return %c0_i32, %c0_i32_0 : i32, i32
  }
  func.func @transform_12(%arg0: i32) -> (i32, i32) {
    %c0_i32 = arith.constant 0 : i32
    %c0_i32_0 = arith.constant 0 : i32
    %c0_i32_1 = arith.constant 0 : i32
    return %c0_i32, %c0_i32_0 : i32, i32
  }
  func.func @transform_13(%arg0: i32) -> (i32, i32) {
    %c0_i32 = arith.constant 0 : i32
    %c0_i32_0 = arith.constant 0 : i32
    %c0_i32_1 = arith.constant 0 : i32
    return %c0_i32, %c0_i32_0 : i32, i32
  }
  func.func @transform_14(%arg0: i32) -> (i32, i32) {
    %c0_i32 = arith.constant 0 : i32
    %c0_i32_0 = arith.constant 0 : i32
    %c0_i32_1 = arith.constant 0 : i32
    return %c0_i32, %c0_i32_0 : i32, i32
  }
  func.func @transform_15(%arg0: i32) -> (i32, i32) {
    %c0_i32 = arith.constant 0 : i32
    %c0_i32_0 = arith.constant 0 : i32
    %c0_i32_1 = arith.constant 0 : i32
    return %c0_i32, %c0_i32_0 : i32, i32
  }
  func.func @transform_16(%arg0: i32) -> (i32, i32) {
    %c0_i32 = arith.constant 0 : i32
    %c0_i32_0 = arith.constant 0 : i32
    %c0_i32_1 = arith.constant 0 : i32
    return %c0_i32, %c0_i32_0 : i32, i32
  }
  func.func @transform_17(%arg0: i32) -> (i32, i32) {
    %c0_i32 = arith.constant 0 : i32
    %c0_i32_0 = arith.constant 0 : i32
    %c0_i32_1 = arith.constant 0 : i32
    return %c0_i32, %c0_i32_0 : i32, i32
  }
  func.func @transform_18(%arg0: i32) -> (i32, i32, i32) {
    %c0_i32 = arith.constant 0 : i32
    %c0_i32_0 = arith.constant 0 : i32
    %c0_i32_1 = arith.constant 0 : i32
    return %arg0, %c0_i32, %c0_i32_0 : i32, i32, i32
  }
  func.func @transform_19(%arg0: i32) -> (i32, i32, i32) {
    %c0_i32 = arith.constant 0 : i32
    %c0_i32_0 = arith.constant 0 : i32
    %c0_i32_1 = arith.constant 0 : i32
    return %arg0, %c0_i32, %c0_i32_0 : i32, i32, i32
  }
  func.func @transform_20(%arg0: i32) -> (i32, i32, i32) {
    %c0_i32 = arith.constant 0 : i32
    %c0_i32_0 = arith.constant 0 : i32
    %c0_i32_1 = arith.constant 0 : i32
    return %arg0, %c0_i32, %c0_i32_0 : i32, i32, i32
  }
}

</mosaic_0001>

<llo_original>
// kernel: final_classifier_forward.1
$region0: #{final_classifier_forward.1}
  #allocation0 [shape = 'u32[]', space=smem, size = 0x4, offset = 0x4, fixed_abs, tag = 'smem constant byte address 0x4 - core index']
  #allocation1 [shape = 'u32[144,128]{1,0:T(1,128)}', space=vmem, size = 0x12000, scoped, tag = 'internal scratch']
  %s0 = inlined_call_operand.vmem [shape: f32[2,64,128], index: 0, kind: input, shape index: {}]
  %s1 = inlined_call_operand.vmem [shape: f32[2,64,256], index: 1, kind: input, shape index: {}]
  %s2 = inlined_call_operand.vmem [shape: f32[2,64,256], index: 2, kind: input, shape index: {}]
  %s3 = inlined_call_operand.vmem [shape: f32[2,64,256], index: 3, kind: input, shape index: {}]
  %s4 = inlined_call_operand.vmem [shape: f32[128,256], index: 4, kind: input, shape index: {}]
  %s5 = inlined_call_operand.vmem [shape: f32[48,64], index: 5, kind: input, shape index: {}]
  %s6 = inlined_call_operand.vmem [shape: f32[48,1], index: 6, kind: input, shape index: {}]
  %s7 = inlined_call_operand.vmem [shape: f32[64,64], index: 7, kind: input, shape index: {}]
  %s8 = inlined_call_operand.vmem [shape: f32[64,48], index: 8, kind: input, shape index: {}]
  %s9 = inlined_call_operand.vmem [shape: f32[64,1], index: 9, kind: input, shape index: {}]
  %s10 = inlined_call_operand.vmem [shape: f32[64,64], index: 10, kind: input, shape index: {}]
  %s11 = inlined_call_operand.vmem [shape: f32[64,1], index: 11, kind: input, shape index: {}]
  %s12 = inlined_call_operand.vmem [shape: f32[7,64], index: 12, kind: input, shape index: {}]
  %s13 = inlined_call_operand.vmem [shape: f32[7,1], index: 13, kind: input, shape index: {}]
  %s14 = inlined_call_operand.vmem [shape: f32[3,64], index: 14, kind: input, shape index: {}]
  %s15 = inlined_call_operand.vmem [shape: f32[3,1], index: 15, kind: input, shape index: {}]
  %s16 = inlined_call_operand.vmem [shape: f32[2,64], index: 16, kind: input, shape index: {}]
  %s17 = inlined_call_operand.vmem [shape: f32[2,1], index: 17, kind: input, shape index: {}]
  %s18 = inlined_call_operand.vmem [shape: f32[2,7,256], index: 18, kind: output, shape index: {0}]
  %s19 = inlined_call_operand.vmem [shape: f32[2,3,256], index: 19, kind: output, shape index: {1}]
  %s20 = inlined_call_operand.vmem [shape: f32[2,2,256], index: 20, kind: output, shape index: {2}]
  %21 = xla_tuple %s18, %s19, %s20
  %s22 = sld [smem:[#allocation0]]
  $region121: #{final_classifier_forward.1} parent=0
    _
  %s24 = ssub.s32 1, %s22
  %s25 = scalar_select 0, %s24, %s22
  loop: start=0, step=1, limit=4
  $region2: #{final_classifier_forward.1} parent=0 // loop_pre_header
    _
  $region3: #{final_classifier_forward.1} parent=0 // loop_header
    %s27 = sphi 0, %s31
    %p28 = scmp.ge.s32.totalorder %s27, 4
    %s37 = sphi 0, %s39
    %s40 = sphi 0, %s37
    %s41 = sphi 0, %s40
    %s57 = sphi 0, %s41
    %s63 = sphi 0, %s65
    %s66 = sphi 0, %s63
    %s67 = sphi 0, %s66
    %s83 = sphi 0, %s67
    %s89 = sphi 0, %s91
    %s92 = sphi 0, %s89
    %s93 = sphi 0, %s92
    %s109 = sphi 0, %s93
    %s115 = sphi 0, %s117
    %s118 = sphi 0, %s115
    %s119 = sphi 0, %s118
    %s135 = sphi 0, %s119
    %s139 = sphi 0, %s139
    %s141 = sphi 0, %s139
    %s142 = sphi 0, %s141
    %s156 = sphi 0, %s142
    %s160 = sphi 0, %s160
    %s162 = sphi 0, %s160
    %s163 = sphi 0, %s162
    %s177 = sphi 0, %s163
    %s181 = sphi 0, %s181
    %s183 = sphi 0, %s181
    %s184 = sphi 0, %s183
    %s198 = sphi 0, %s184
    %s202 = sphi 0, %s202
    %s204 = sphi 0, %s202
    %s205 = sphi 0, %s204
    %s219 = sphi 0, %s205
    %s223 = sphi 0, %s223
    %s225 = sphi 0, %s223
    %s226 = sphi 0, %s225
    %s240 = sphi 0, %s226
    %s244 = sphi 0, %s244
    %s246 = sphi 0, %s244
    %s247 = sphi 0, %s246
    %s261 = sphi 0, %s247
    %s265 = sphi 0, %s265
    %s267 = sphi 0, %s265
    %s268 = sphi 0, %s267
    %s282 = sphi 0, %s268
    %s286 = sphi 0, %s286
    %s288 = sphi 0, %s286
    %s289 = sphi 0, %s288
    %s303 = sphi 0, %s289
    %s307 = sphi 0, %s307
    %s309 = sphi 0, %s307
    %s310 = sphi 0, %s309
    %s324 = sphi 0, %s310
    %s328 = sphi 0, %s328
    %s330 = sphi 0, %s328
    %s331 = sphi 0, %s330
    %s345 = sphi 0, %s331
    %s349 = sphi 0, %s349
    %s351 = sphi 0, %s349
    %s352 = sphi 0, %s351
    %s366 = sphi 0, %s352
    %s370 = sphi 0, %s370
    %s372 = sphi 0, %s370
    %s373 = sphi 0, %s372
    %s387 = sphi 0, %s373
    %s391 = sphi 0, %s391
    %s393 = sphi 0, %s391
    %s394 = sphi 0, %s393
    %s408 = sphi 0, %s394
    %s412 = sphi 0, %s412
    %s414 = sphi 0, %s412
    %s415 = sphi 0, %s414
    %s429 = sphi 0, %s415
    %s435 = sphi 0, %s437
    %s438 = sphi 0, %s435
    %s439 = sphi 0, %s438
    %s455 = sphi 0, %s439
    %s461 = sphi 0, %s463
    %s464 = sphi 0, %s461
    %s465 = sphi 0, %s464
    %s481 = sphi 0, %s465
    %s487 = sphi 0, %s489
    %s490 = sphi 0, %s487
    %s491 = sphi 0, %s490
    %s507 = sphi 0, %s491
  $region4: #{final_classifier_forward.1} parent=0 // loop_header_branch
    %30 = sbr.rel (%p28) target = $region8
  $region5: #{final_classifier_forward.1} parent=0 // loop_body
    %s32 = ssub.s32 %s27, 1
    %s33 = ssub.s32 %s27, 2
    %s34 = sadd.s32 %s27, 1
    %s35 = ssub.s32 %s27, %s34
    %p36 = scmp.eq.s32.totalorder %s35, 0
    %s38 = sadd.s32 %s37, 1
    %s39 = scalar_select %p36, %s37, %s38
    %p42 = pneg %p36
    %p43 = scmp.eq.s32.totalorder %s27, 1
    %p44 = por %p42, %p43
    %p45 = scmp.ne.s32.totalorder %s37, %s40
    %p46 = scmp.eq.s32.totalorder %s27, 0
    %p47 = por %p45, %p46
    %p48 = scmp.ne.s32.totalorder %s37, %s40
    %p49 = scmp.eq.s32.totalorder %s32, 1
    %p50 = por %p48, %p49
    %p51 = scmp.ne.s32.totalorder %s40, %s41
    %p52 = scmp.eq.s32.totalorder %s32, 0
    %p53 = por %p51, %p52
    %p54 = scmp.ne.s32.totalorder %s40, %s41
    %p55 = scmp.eq.s32.totalorder %s33, 1
    %p56 = por %p54, %p55
    %p58 = scmp.ne.s32.totalorder %s41, %s57
    %p59 = scmp.eq.s32.totalorder %s33, 0
    %p60 = por %p58, %p59
    %s61 = ssub.s32 %s27, %s34
    %p62 = scmp.eq.s32.totalorder %s61, 0
    %s64 = sadd.s32 %s63, 1
    %s65 = scalar_select %p62, %s63, %s64
    %p68 = pneg %p62
    %p69 = scmp.eq.s32.totalorder %s27, 1
    %p70 = por %p68, %p69
    %p71 = scmp.ne.s32.totalorder %s63, %s66
    %p72 = scmp.eq.s32.totalorder %s27, 0
    %p73 = por %p71, %p72
    %p74 = scmp.ne.s32.totalorder %s63, %s66
    %p75 = scmp.eq.s32.totalorder %s32, 1
    %p76 = por %p74, %p75
    %p77 = scmp.ne.s32.totalorder %s66, %s67
    %p78 = scmp.eq.s32.totalorder %s32, 0
    %p79 = por %p77, %p78
    %p80 = scmp.ne.s32.totalorder %s66, %s67
    %p81 = scmp.eq.s32.totalorder %s33, 1
    %p82 = por %p80, %p81
    %p84 = scmp.ne.s32.totalorder %s67, %s83
    %p85 = scmp.eq.s32.totalorder %s33, 0
    %p86 = por %p84, %p85
    %s87 = ssub.s32 %s27, %s34
    %p88 = scmp.eq.s32.totalorder %s87, 0
    %s90 = sadd.s32 %s89, 1
    %s91 = scalar_select %p88, %s89, %s90
    %p94 = pneg %p88
    %p95 = scmp.eq.s32.totalorder %s27, 1
    %p96 = por %p94, %p95
    %p97 = scmp.ne.s32.totalorder %s89, %s92
    %p98 = scmp.eq.s32.totalorder %s27, 0
    %p99 = por %p97, %p98
    %p100 = scmp.ne.s32.totalorder %s89, %s92
    %p101 = scmp.eq.s32.totalorder %s32, 1
    %p102 = por %p100, %p101
    %p103 = scmp.ne.s32.totalorder %s92, %s93
    %p104 = scmp.eq.s32.totalorder %s32, 0
    %p105 = por %p103, %p104
    %p106 = scmp.ne.s32.totalorder %s92, %s93
    %p107 = scmp.eq.s32.totalorder %s33, 1
    %p108 = por %p106, %p107
    %p110 = scmp.ne.s32.totalorder %s93, %s109
    %p111 = scmp.eq.s32.totalorder %s33, 0
    %p112 = por %p110, %p111
    %s113 = ssub.s32 %s27, %s34
    %p114 = scmp.eq.s32.totalorder %s113, 0
    %s116 = sadd.s32 %s115, 1
    %s117 = scalar_select %p114, %s115, %s116
    %p120 = pneg %p114
    %p121 = scmp.eq.s32.totalorder %s27, 1
    %p122 = por %p120, %p121
    %p123 = scmp.ne.s32.totalorder %s115, %s118
    %p124 = scmp.eq.s32.totalorder %s27, 0
    %p125 = por %p123, %p124
    %p126 = scmp.ne.s32.totalorder %s115, %s118
    %p127 = scmp.eq.s32.totalorder %s32, 1
    %p128 = por %p126, %p127
    %p129 = scmp.ne.s32.totalorder %s118, %s119
    %p130 = scmp.eq.s32.totalorder %s32, 0
    %p131 = por %p129, %p130
    %p132 = scmp.ne.s32.totalorder %s118, %s119
    %p133 = scmp.eq.s32.totalorder %s33, 1
    %p134 = por %p132, %p133
    %p136 = scmp.ne.s32.totalorder %s119, %s135
    %p137 = scmp.eq.s32.totalorder %s33, 0
    %p138 = por %p136, %p137
    %s140 = sadd.s32 %s139, 1
    %p143 = scmp.eq.s32.totalorder %s27, 1
    %p144 = scmp.ne.s32.totalorder %s139, %s141
    %p145 = scmp.eq.s32.totalorder %s27, 0
    %p146 = por %p144, %p145
    %p147 = scmp.ne.s32.totalorder %s139, %s141
    %p148 = scmp.eq.s32.totalorder %s32, 1
    %p149 = por %p147, %p148
    %p150 = scmp.ne.s32.totalorder %s141, %s142
    %p151 = scmp.eq.s32.totalorder %s32, 0
    %p152 = por %p150, %p151
    %p153 = scmp.ne.s32.totalorder %s141, %s142
    %p154 = scmp.eq.s32.totalorder %s33, 1
    %p155 = por %p153, %p154
    %p157 = scmp.ne.s32.totalorder %s142, %s156
    %p158 = scmp.eq.s32.totalorder %s33, 0
    %p159 = por %p157, %p158
    %s161 = sadd.s32 %s160, 1
    %p164 = scmp.eq.s32.totalorder %s27, 1
    %p165 = scmp.ne.s32.totalorder %s160, %s162
    %p166 = scmp.eq.s32.totalorder %s27, 0
    %p167 = por %p165, %p166
    %p168 = scmp.ne.s32.totalorder %s160, %s162
    %p169 = scmp.eq.s32.totalorder %s32, 1
    %p170 = por %p168, %p169
    %p171 = scmp.ne.s32.totalorder %s162, %s163
    %p172 = scmp.eq.s32.totalorder %s32, 0
    %p173 = por %p171, %p172
    %p174 = scmp.ne.s32.totalorder %s162, %s163
    %p175 = scmp.eq.s32.totalorder %s33, 1
    %p176 = por %p174, %p175
    %p178 = scmp.ne.s32.totalorder %s163, %s177
    %p179 = scmp.eq.s32.totalorder %s33, 0
    %p180 = por %p178, %p179
    %s182 = sadd.s32 %s181, 1
    %p185 = scmp.eq.s32.totalorder %s27, 1
    %p186 = scmp.ne.s32.totalorder %s181, %s183
    %p187 = scmp.eq.s32.totalorder %s27, 0
    %p188 = por %p186, %p187
    %p189 = scmp.ne.s32.totalorder %s181, %s183
    %p190 = scmp.eq.s32.totalorder %s32, 1
    %p191 = por %p189, %p190
    %p192 = scmp.ne.s32.totalorder %s183, %s184
    %p193 = scmp.eq.s32.totalorder %s32, 0
    %p194 = por %p192, %p193
    %p195 = scmp.ne.s32.totalorder %s183, %s184
    %p196 = scmp.eq.s32.totalorder %s33, 1
    %p197 = por %p195, %p196
    %p199 = scmp.ne.s32.totalorder %s184, %s198
    %p200 = scmp.eq.s32.totalorder %s33, 0
    %p201 = por %p199, %p200
    %s203 = sadd.s32 %s202, 1
    %p206 = scmp.eq.s32.totalorder %s27, 1
    %p207 = scmp.ne.s32.totalorder %s202, %s204
    %p208 = scmp.eq.s32.totalorder %s27, 0
    %p209 = por %p207, %p208
    %p210 = scmp.ne.s32.totalorder %s202, %s204
    %p211 = scmp.eq.s32.totalorder %s32, 1
    %p212 = por %p210, %p211
    %p213 = scmp.ne.s32.totalorder %s204, %s205
    %p214 = scmp.eq.s32.totalorder %s32, 0
    %p215 = por %p213, %p214
    %p216 = scmp.ne.s32.totalorder %s204, %s205
    %p217 = scmp.eq.s32.totalorder %s33, 1
    %p218 = por %p216, %p217
    %p220 = scmp.ne.s32.totalorder %s205, %s219
    %p221 = scmp.eq.s32.totalorder %s33, 0
    %p222 = por %p220, %p221
    %s224 = sadd.s32 %s223, 1
    %p227 = scmp.eq.s32.totalorder %s27, 1
    %p228 = scmp.ne.s32.totalorder %s223, %s225
    %p229 = scmp.eq.s32.totalorder %s27, 0
    %p230 = por %p228, %p229
    %p231 = scmp.ne.s32.totalorder %s223, %s225
    %p232 = scmp.eq.s32.totalorder %s32, 1
    %p233 = por %p231, %p232
    %p234 = scmp.ne.s32.totalorder %s225, %s226
    %p235 = scmp.eq.s32.totalorder %s32, 0
    %p236 = por %p234, %p235
    %p237 = scmp.ne.s32.totalorder %s225, %s226
    %p238 = scmp.eq.s32.totalorder %s33, 1
    %p239 = por %p237, %p238
    %p241 = scmp.ne.s32.totalorder %s226, %s240
    %p242 = scmp.eq.s32.totalorder %s33, 0
    %p243 = por %p241, %p242
    %s245 = sadd.s32 %s244, 1
    %p248 = scmp.eq.s32.totalorder %s27, 1
    %p249 = scmp.ne.s32.totalorder %s244, %s246
    %p250 = scmp.eq.s32.totalorder %s27, 0
    %p251 = por %p249, %p250
    %p252 = scmp.ne.s32.totalorder %s244, %s246
    %p253 = scmp.eq.s32.totalorder %s32, 1
    %p254 = por %p252, %p253
    %p255 = scmp.ne.s32.totalorder %s246, %s247
    %p256 = scmp.eq.s32.totalorder %s32, 0
    %p257 = por %p255, %p256
    %p258 = scmp.ne.s32.totalorder %s246, %s247
    %p259 = scmp.eq.s32.totalorder %s33, 1
    %p260 = por %p258, %p259
    %p262 = scmp.ne.s32.totalorder %s247, %s261
    %p263 = scmp.eq.s32.totalorder %s33, 0
    %p264 = por %p262, %p263
    %s266 = sadd.s32 %s265, 1
    %p269 = scmp.eq.s32.totalorder %s27, 1
    %p270 = scmp.ne.s32.totalorder %s265, %s267
    %p271 = scmp.eq.s32.totalorder %s27, 0
    %p272 = por %p270, %p271
    %p273 = scmp.ne.s32.totalorder %s265, %s267
    %p274 = scmp.eq.s32.totalorder %s32, 1
    %p275 = por %p273, %p274
    %p276 = scmp.ne.s32.totalorder %s267, %s268
    %p277 = scmp.eq.s32.totalorder %s32, 0
    %p278 = por %p276, %p277
    %p279 = scmp.ne.s32.totalorder %s267, %s268
    %p280 = scmp.eq.s32.totalorder %s33, 1
    %p281 = por %p279, %p280
    %p283 = scmp.ne.s32.totalorder %s268, %s282
    %p284 = scmp.eq.s32.totalorder %s33, 0
    %p285 = por %p283, %p284
    %s287 = sadd.s32 %s286, 1
    %p290 = scmp.eq.s32.totalorder %s27, 1
    %p291 = scmp.ne.s32.totalorder %s286, %s288
    %p292 = scmp.eq.s32.totalorder %s27, 0
    %p293 = por %p291, %p292
    %p294 = scmp.ne.s32.totalorder %s286, %s288
    %p295 = scmp.eq.s32.totalorder %s32, 1
    %p296 = por %p294, %p295
    %p297 = scmp.ne.s32.totalorder %s288, %s289
    %p298 = scmp.eq.s32.totalorder %s32, 0
    %p299 = por %p297, %p298
    %p300 = scmp.ne.s32.totalorder %s288, %s289
    %p301 = scmp.eq.s32.totalorder %s33, 1
    %p302 = por %p300, %p301
    %p304 = scmp.ne.s32.totalorder %s289, %s303
    %p305 = scmp.eq.s32.totalorder %s33, 0
    %p306 = por %p304, %p305
    %s308 = sadd.s32 %s307, 1
    %p311 = scmp.eq.s32.totalorder %s27, 1
    %p312 = scmp.ne.s32.totalorder %s307, %s309
    %p313 = scmp.eq.s32.totalorder %s27, 0
    %p314 = por %p312, %p313
    %p315 = scmp.ne.s32.totalorder %s307, %s309
    %p316 = scmp.eq.s32.totalorder %s32, 1
    %p317 = por %p315, %p316
    %p318 = scmp.ne.s32.totalorder %s309, %s310
    %p319 = scmp.eq.s32.totalorder %s32, 0
    %p320 = por %p318, %p319
    %p321 = scmp.ne.s32.totalorder %s309, %s310
    %p322 = scmp.eq.s32.totalorder %s33, 1
    %p323 = por %p321, %p322
    %p325 = scmp.ne.s32.totalorder %s310, %s324
    %p326 = scmp.eq.s32.totalorder %s33, 0
    %p327 = por %p325, %p326
    %s329 = sadd.s32 %s328, 1
    %p332 = scmp.eq.s32.totalorder %s27, 1
    %p333 = scmp.ne.s32.totalorder %s328, %s330
    %p334 = scmp.eq.s32.totalorder %s27, 0
    %p335 = por %p333, %p334
    %p336 = scmp.ne.s32.totalorder %s328, %s330
    %p337 = scmp.eq.s32.totalorder %s32, 1
    %p338 = por %p336, %p337
    %p339 = scmp.ne.s32.totalorder %s330, %s331
    %p340 = scmp.eq.s32.totalorder %s32, 0
    %p341 = por %p339, %p340
    %p342 = scmp.ne.s32.totalorder %s330, %s331
    %p343 = scmp.eq.s32.totalorder %s33, 1
    %p344 = por %p342, %p343
    %p346 = scmp.ne.s32.totalorder %s331, %s345
    %p347 = scmp.eq.s32.totalorder %s33, 0
    %p348 = por %p346, %p347
    %s350 = sadd.s32 %s349, 1
    %p353 = scmp.eq.s32.totalorder %s27, 1
    %p354 = scmp.ne.s32.totalorder %s349, %s351
    %p355 = scmp.eq.s32.totalorder %s27, 0
    %p356 = por %p354, %p355
    %p357 = scmp.ne.s32.totalorder %s349, %s351
    %p358 = scmp.eq.s32.totalorder %s32, 1
    %p359 = por %p357, %p358
    %p360 = scmp.ne.s32.totalorder %s351, %s352
    %p361 = scmp.eq.s32.totalorder %s32, 0
    %p362 = por %p360, %p361
    %p363 = scmp.ne.s32.totalorder %s351, %s352
    %p364 = scmp.eq.s32.totalorder %s33, 1
    %p365 = por %p363, %p364
    %p367 = scmp.ne.s32.totalorder %s352, %s366
    %p368 = scmp.eq.s32.totalorder %s33, 0
    %p369 = por %p367, %p368
    %s371 = sadd.s32 %s370, 1
    %p374 = scmp.eq.s32.totalorder %s27, 1
    %p375 = scmp.ne.s32.totalorder %s370, %s372
    %p376 = scmp.eq.s32.totalorder %s27, 0
    %p377 = por %p375, %p376
    %p378 = scmp.ne.s32.totalorder %s370, %s372
    %p379 = scmp.eq.s32.totalorder %s32, 1
    %p380 = por %p378, %p379
    %p381 = scmp.ne.s32.totalorder %s372, %s373
    %p382 = scmp.eq.s32.totalorder %s32, 0
    %p383 = por %p381, %p382
    %p384 = scmp.ne.s32.totalorder %s372, %s373
    %p385 = scmp.eq.s32.totalorder %s33, 1
    %p386 = por %p384, %p385
    %p388 = scmp.ne.s32.totalorder %s373, %s387
    %p389 = scmp.eq.s32.totalorder %s33, 0
    %p390 = por %p388, %p389
    %s392 = sadd.s32 %s391, 1
    %p395 = scmp.eq.s32.totalorder %s27, 1
    %p396 = scmp.ne.s32.totalorder %s391, %s393
    %p397 = scmp.eq.s32.totalorder %s27, 0
    %p398 = por %p396, %p397
    %p399 = scmp.ne.s32.totalorder %s391, %s393
    %p400 = scmp.eq.s32.totalorder %s32, 1
    %p401 = por %p399, %p400
    %p402 = scmp.ne.s32.totalorder %s393, %s394
    %p403 = scmp.eq.s32.totalorder %s32, 0
    %p404 = por %p402, %p403
    %p405 = scmp.ne.s32.totalorder %s393, %s394
    %p406 = scmp.eq.s32.totalorder %s33, 1
    %p407 = por %p405, %p406
    %p409 = scmp.ne.s32.totalorder %s394, %s408
    %p410 = scmp.eq.s32.totalorder %s33, 0
    %p411 = por %p409, %p410
    %s413 = sadd.s32 %s412, 1
    %p416 = scmp.eq.s32.totalorder %s27, 1
    %p417 = scmp.ne.s32.totalorder %s412, %s414
    %p418 = scmp.eq.s32.totalorder %s27, 0
    %p419 = por %p417, %p418
    %p420 = scmp.ne.s32.totalorder %s412, %s414
    %p421 = scmp.eq.s32.totalorder %s32, 1
    %p422 = por %p420, %p421
    %p423 = scmp.ne.s32.totalorder %s414, %s415
    %p424 = scmp.eq.s32.totalorder %s32, 0
    %p425 = por %p423, %p424
    %p426 = scmp.ne.s32.totalorder %s414, %s415
    %p427 = scmp.eq.s32.totalorder %s33, 1
    %p428 = por %p426, %p427
    %p430 = scmp.ne.s32.totalorder %s415, %s429
    %p431 = scmp.eq.s32.totalorder %s33, 0
    %p432 = por %p430, %p431
    %s433 = ssub.s32 %s27, %s34
    %p434 = scmp.eq.s32.totalorder %s433, 0
    %s436 = sadd.s32 %s435, 1
    %s437 = scalar_select %p434, %s435, %s436
    %p440 = pneg %p434
    %p441 = scmp.eq.s32.totalorder %s27, 1
    %p442 = por %p440, %p441
    %p443 = scmp.ne.s32.totalorder %s435, %s438
    %p444 = scmp.eq.s32.totalorder %s27, 0
    %p445 = por %p443, %p444
    %p446 = scmp.ne.s32.totalorder %s435, %s438
    %p447 = scmp.eq.s32.totalorder %s32, 1
    %p448 = por %p446, %p447
    %p449 = scmp.ne.s32.totalorder %s438, %s439
    %p450 = scmp.eq.s32.totalorder %s32, 0
    %p451 = por %p449, %p450
    %p452 = scmp.ne.s32.totalorder %s438, %s439
    %p453 = scmp.eq.s32.totalorder %s33, 1
    %p454 = por %p452, %p453
    %p456 = scmp.ne.s32.totalorder %s439, %s455
    %p457 = scmp.eq.s32.totalorder %s33, 0
    %p458 = por %p456, %p457
    %s459 = ssub.s32 %s27, %s34
    %p460 = scmp.eq.s32.totalorder %s459, 0
    %s462 = sadd.s32 %s461, 1
    %s463 = scalar_select %p460, %s461, %s462
    %p466 = pneg %p460
    %p467 = scmp.eq.s32.totalorder %s27, 1
    %p468 = por %p466, %p467
    %p469 = scmp.ne.s32.totalorder %s461, %s464
    %p470 = scmp.eq.s32.totalorder %s27, 0
    %p471 = por %p469, %p470
    %p472 = scmp.ne.s32.totalorder %s461, %s464
    %p473 = scmp.eq.s32.totalorder %s32, 1
    %p474 = por %p472, %p473
    %p475 = scmp.ne.s32.totalorder %s464, %s465
    %p476 = scmp.eq.s32.totalorder %s32, 0
    %p477 = por %p475, %p476
    %p478 = scmp.ne.s32.totalorder %s464, %s465
    %p479 = scmp.eq.s32.totalorder %s33, 1
    %p480 = por %p478, %p479
    %p482 = scmp.ne.s32.totalorder %s465, %s481
    %p483 = scmp.eq.s32.totalorder %s33, 0
    %p484 = por %p482, %p483
    %s485 = ssub.s32 %s27, %s34
    %p486 = scmp.eq.s32.totalorder %s485, 0
    %s488 = sadd.s32 %s487, 1
    %s489 = scalar_select %p486, %s487, %s488
    %p492 = pneg %p486
    %p493 = scmp.eq.s32.totalorder %s27, 1
    %p494 = por %p492, %p493
    %p495 = scmp.ne.s32.totalorder %s487, %s490
    %p496 = scmp.eq.s32.totalorder %s27, 0
    %p497 = por %p495, %p496
    %p498 = scmp.ne.s32.totalorder %s487, %s490
    %p499 = scmp.eq.s32.totalorder %s32, 1
    %p500 = por %p498, %p499
    %p501 = scmp.ne.s32.totalorder %s490, %s491
    %p502 = scmp.eq.s32.totalorder %s32, 0
    %p503 = por %p501, %p502
    %p504 = scmp.ne.s32.totalorder %s490, %s491
    %p505 = scmp.eq.s32.totalorder %s33, 1
    %p506 = por %p504, %p505
    %p508 = scmp.ne.s32.totalorder %s491, %s507
    %p509 = scmp.eq.s32.totalorder %s33, 0
    %p510 = por %p508, %p509
    %p511 = scmp.le.s32.totalorder 1, %s27
    %p512 = scmp.lt.s32.totalorder %s27, 3
    %p513 = pnand %p511, %p512
    %p514 = pneg %p513
    // Predicated region
    $region9: #{final_classifier_forward.1} parent=5 // pred_check
      _
    $region10: #{final_classifier_forward.1} parent=5 // pred_check_branch
      %516 = sbr.rel (%p513) target = $region12
    $region11: #{final_classifier_forward.1} parent=5 // pred_region
      %s517 = ssub.s32 %s27, 1
      // Predicated region
      $region13: #{final_classifier_forward.1} parent=11 // pred_check
        %p518 = pneg %p152
      $region14: #{final_classifier_forward.1} parent=11 // pred_check_branch
        %520 = sbr.rel (%p518) target = $region16
      $region15: #{final_classifier_forward.1} parent=11 // pred_region
        _
      $region16: #{final_classifier_forward.1} parent=11 // pred_fallthru
        _
      // Predicated region
      $region17: #{final_classifier_forward.1} parent=11 // pred_check
        %p521 = pneg %p173
      $region18: #{final_classifier_forward.1} parent=11 // pred_check_branch
        %523 = sbr.rel (%p521) target = $region20
      $region19: #{final_classifier_forward.1} parent=11 // pred_region
        _
      $region20: #{final_classifier_forward.1} parent=11 // pred_fallthru
        _
      // Predicated region
      $region21: #{final_classifier_forward.1} parent=11 // pred_check
        %p524 = pneg %p194
      $region22: #{final_classifier_forward.1} parent=11 // pred_check_branch
        %526 = sbr.rel (%p524) target = $region24
      $region23: #{final_classifier_forward.1} parent=11 // pred_region
        _
      $region24: #{final_classifier_forward.1} parent=11 // pred_fallthru
        _
      // Predicated region
      $region25: #{final_classifier_forward.1} parent=11 // pred_check
        %p527 = pneg %p215
      $region26: #{final_classifier_forward.1} parent=11 // pred_check_branch
        %529 = sbr.rel (%p527) target = $region28
      $region27: #{final_classifier_forward.1} parent=11 // pred_region
        _
      $region28: #{final_classifier_forward.1} parent=11 // pred_fallthru
        _
      // Predicated region
      $region29: #{final_classifier_forward.1} parent=11 // pred_check
        %p530 = pneg %p236
      $region30: #{final_classifier_forward.1} parent=11 // pred_check_branch
        %532 = sbr.rel (%p530) target = $region32
      $region31: #{final_classifier_forward.1} parent=11 // pred_region
        _
      $region32: #{final_classifier_forward.1} parent=11 // pred_fallthru
        _
      // Predicated region
      $region33: #{final_classifier_forward.1} parent=11 // pred_check
        %p533 = pneg %p257
      $region34: #{final_classifier_forward.1} parent=11 // pred_check_branch
        %535 = sbr.rel (%p533) target = $region36
      $region35: #{final_classifier_forward.1} parent=11 // pred_region
        _
      $region36: #{final_classifier_forward.1} parent=11 // pred_fallthru
        _
      // Predicated region
      $region37: #{final_classifier_forward.1} parent=11 // pred_check
        %p536 = pneg %p278
      $region38: #{final_classifier_forward.1} parent=11 // pred_check_branch
        %538 = sbr.rel (%p536) target = $region40
      $region39: #{final_classifier_forward.1} parent=11 // pred_region
        _
      $region40: #{final_classifier_forward.1} parent=11 // pred_fallthru
        _
      // Predicated region
      $region41: #{final_classifier_forward.1} parent=11 // pred_check
        %p539 = pneg %p299
      $region42: #{final_classifier_forward.1} parent=11 // pred_check_branch
        %541 = sbr.rel (%p539) target = $region44
      $region43: #{final_classifier_forward.1} parent=11 // pred_region
        _
      $region44: #{final_classifier_forward.1} parent=11 // pred_fallthru
        _
      // Predicated region
      $region45: #{final_classifier_forward.1} parent=11 // pred_check
        %p542 = pneg %p320
      $region46: #{final_classifier_forward.1} parent=11 // pred_check_branch
        %544 = sbr.rel (%p542) target = $region48
      $region47: #{final_classifier_forward.1} parent=11 // pred_region
        _
      $region48: #{final_classifier_forward.1} parent=11 // pred_fallthru
        _
      // Predicated region
      $region49: #{final_classifier_forward.1} parent=11 // pred_check
        %p545 = pneg %p341
      $region50: #{final_classifier_forward.1} parent=11 // pred_check_branch
        %547 = sbr.rel (%p545) target = $region52
      $region51: #{final_classifier_forward.1} parent=11 // pred_region
        _
      $region52: #{final_classifier_forward.1} parent=11 // pred_fallthru
        _
      // Predicated region
      $region53: #{final_classifier_forward.1} parent=11 // pred_check
        %p548 = pneg %p362
      $region54: #{final_classifier_forward.1} parent=11 // pred_check_branch
        %550 = sbr.rel (%p548) target = $region56
      $region55: #{final_classifier_forward.1} parent=11 // pred_region
        _
      $region56: #{final_classifier_forward.1} parent=11 // pred_fallthru
        _
      // Predicated region
      $region57: #{final_classifier_forward.1} parent=11 // pred_check
        %p551 = pneg %p383
      $region58: #{final_classifier_forward.1} parent=11 // pred_check_branch
        %553 = sbr.rel (%p551) target = $region60
      $region59: #{final_classifier_forward.1} parent=11 // pred_region
        _
      $region60: #{final_classifier_forward.1} parent=11 // pred_fallthru
        _
      // Predicated region
      $region61: #{final_classifier_forward.1} parent=11 // pred_check
        %p554 = pneg %p404
      $region62: #{final_classifier_forward.1} parent=11 // pred_check_branch
        %556 = sbr.rel (%p554) target = $region64
      $region63: #{final_classifier_forward.1} parent=11 // pred_region
        _
      $region64: #{final_classifier_forward.1} parent=11 // pred_fallthru
        _
      // Predicated region
      $region65: #{final_classifier_forward.1} parent=11 // pred_check
        %p557 = pneg %p425
      $region66: #{final_classifier_forward.1} parent=11 // pred_check_branch
        %559 = sbr.rel (%p557) target = $region68
      $region67: #{final_classifier_forward.1} parent=11 // pred_region
        _
      $region68: #{final_classifier_forward.1} parent=11 // pred_fallthru
        _
    $region12: #{final_classifier_forward.1} parent=5 // pred_fallthru
      _
    %p560 = scmp.lt.s32.totalorder %s27, 2
    // Predicated region
    $region69: #{final_classifier_forward.1} parent=5 // pred_check
      %p561 = pneg %p560
    $region70: #{final_classifier_forward.1} parent=5 // pred_check_branch
      %563 = sbr.rel (%p561) target = $region72
    $region71: #{final_classifier_forward.1} parent=5 // pred_region
      // Predicated region
      $region73: #{final_classifier_forward.1} parent=71 // pred_check
        %p564 = pneg %p47
      $region74: #{final_classifier_forward.1} parent=71 // pred_check_branch
        %566 = sbr.rel (%p564) target = $region76
      $region75: #{final_classifier_forward.1} parent=71 // pred_region
        %p567 = scmp.lt.s32.totalorder %s27, 1
        %s568 = scalar_select %p567, %s27, 1
        %s569 = smul.addr %s568, 8
        %s570 = smul.addr %s569, 8
        %s571 = scalar_lea.vmem %s0, %s570
      $region76: #{final_classifier_forward.1} parent=71 // pred_fallthru
        _
      // Predicated region
      $region77: #{final_classifier_forward.1} parent=71 // pred_check
        %p572 = pneg %p73
      $region78: #{final_classifier_forward.1} parent=71 // pred_check_branch
        %574 = sbr.rel (%p572) target = $region80
      $region79: #{final_classifier_forward.1} parent=71 // pred_region
        %p575 = scmp.lt.s32.totalorder %s27, 1
        %s576 = scalar_select %p575, %s27, 1
        %s577 = smul.addr %s576, 16
        %s578 = smul.addr %s577, 8
        %s579 = scalar_lea.vmem %s1, %s578
      $region80: #{final_classifier_forward.1} parent=71 // pred_fallthru
        _
      // Predicated region
      $region81: #{final_classifier_forward.1} parent=71 // pred_check
        %p580 = pneg %p99
      $region82: #{final_classifier_forward.1} parent=71 // pred_check_branch
        %582 = sbr.rel (%p580) target = $region84
      $region83: #{final_classifier_forward.1} parent=71 // pred_region
        %p583 = scmp.lt.s32.totalorder %s27, 1
        %s584 = scalar_select %p583, %s27, 1
        %s585 = smul.addr %s584, 16
        %s586 = smul.addr %s585, 8
        %s587 = scalar_lea.vmem %s2, %s586
      $region84: #{final_classifier_forward.1} parent=71 // pred_fallthru
        _
      // Predicated region
      $region85: #{final_classifier_forward.1} parent=71 // pred_check
        %p588 = pneg %p125
      $region86: #{final_classifier_forward.1} parent=71 // pred_check_branch
        %590 = sbr.rel (%p588) target = $region88
      $region87: #{final_classifier_forward.1} parent=71 // pred_region
        %p591 = scmp.lt.s32.totalorder %s27, 1
        %s592 = scalar_select %p591, %s27, 1
        %s593 = smul.addr %s592, 16
        %s594 = smul.addr %s593, 8
        %s595 = scalar_lea.vmem %s3, %s594
      $region88: #{final_classifier_forward.1} parent=71 // pred_fallthru
        _
    $region72: #{final_classifier_forward.1} parent=5 // pred_fallthru
      _
    %p596 = scmp.le.s32.totalorder 1, %s27
    %p597 = scmp.lt.s32.totalorder %s27, 3
    %p598 = pnand %p596, %p597
    %p599 = pneg %p598
    // Predicated region
    $region89: #{final_classifier_forward.1} parent=5 // pred_check
      _
    $region90: #{final_classifier_forward.1} parent=5 // pred_check_branch
      %601 = sbr.rel (%p598) target = $region92
    $region91: #{final_classifier_forward.1} parent=5 // pred_region
      %s602 = ssub.s32 %s27, 1
      %p603 = scmp.lt.s32.totalorder %s32, 1
      %s604 = scalar_select %p603, %s32, 1
      %s605 = smul.addr %s604, 8
      %s606 = smul.addr %s605, 8
      %s607 = scalar_lea.vmem %s0, %s606
      %p608 = pneg %p53
      %p609 = pneg %p50
      %p610 = scmp.lt.s32.totalorder %s32, 1
      %s611 = scalar_select %p610, %s32, 1
      %s612 = smul.addr %s611, 16
      %s613 = smul.addr %s612, 8
      %s614 = scalar_lea.vmem %s1, %s613
      %p615 = pneg %p79
      %p616 = pneg %p76
      %p617 = scmp.lt.s32.totalorder %s32, 1
      %s618 = scalar_select %p617, %s32, 1
      %s619 = smul.addr %s618, 16
      %s620 = smul.addr %s619, 8
      %s621 = scalar_lea.vmem %s2, %s620
      %p622 = pneg %p105
      %p623 = pneg %p102
      %p624 = scmp.lt.s32.totalorder %s32, 1
      %s625 = scalar_select %p624, %s32, 1
      %s626 = smul.addr %s625, 16
      %s627 = smul.addr %s626, 8
      %s628 = scalar_lea.vmem %s3, %s627
      %p629 = pneg %p131
      %p630 = pneg %p128
      %p631 = pneg %p152
      %p632 = pneg %p149
      %p633 = pneg %p173
      %p634 = pneg %p170
      %p635 = pneg %p194
      %p636 = pneg %p191
      %p637 = pneg %p215
      %p638 = pneg %p212
      %p639 = pneg %p236
      %p640 = pneg %p233
      %p641 = pneg %p257
      %p642 = pneg %p254
      %p643 = pneg %p278
      %p644 = pneg %p275
      %p645 = pneg %p299
      %p646 = pneg %p296
      %p647 = pneg %p320
      %p648 = pneg %p317
      %p649 = pneg %p341
      %p650 = pneg %p338
      %p651 = pneg %p362
      %p652 = pneg %p359
      %p653 = pneg %p383
      %p654 = pneg %p380
      %p655 = pneg %p404
      %p656 = pneg %p401
      %p657 = pneg %p425
      %p658 = pneg %p422
      %p659 = pneg %p451
      %p660 = pneg %p448
      %p661 = scmp.lt.s32.totalorder %s32, 1
      %s662 = scalar_select %p661, %s32, 1
      %s663 = smul.addr %s662, 2
      %s664 = smul.addr %s663, 8
      %s665 = scalar_lea.vmem %s18, %s664
      %p666 = pneg %p477
      %p667 = pneg %p474
      %p668 = scmp.lt.s32.totalorder %s32, 1
      %s669 = scalar_select %p668, %s32, 1
      %s670 = smul.addr %s669, 2
      %s671 = smul.addr %s670, 4
      %s672 = scalar_lea.vmem %s19, %s671
      %p673 = pneg %p503
      %p674 = pneg %p500
      %p675 = scmp.lt.s32.totalorder %s32, 1
      %s676 = scalar_select %p675, %s32, 1
      %s677 = smul.addr %s676, 2
      %s678 = smul.addr %s677, 2
      %s679 = scalar_lea.vmem %s20, %s678
      %p680 = scmp.lt.s32.totalorder %s32, 1
      %s681 = scalar_select %p680, %s32, 1
      %s682 = smul.addr %s681, 8
      %s683 = smul.addr %s682, 8
      %s684 = scalar_lea.vmem %s0, %s683
      %p685 = scmp.lt.s32.totalorder %s32, 1
      %s686 = scalar_select %p685, %s32, 1
      %s687 = smul.addr %s686, 16
      %s688 = smul.addr %s687, 8
      %s689 = scalar_lea.vmem %s1, %s688
      %p690 = scmp.lt.s32.totalorder %s32, 1
      %s691 = scalar_select %p690, %s32, 1
      %s692 = smul.addr %s691, 16
      %s693 = smul.addr %s692, 8
      %s694 = scalar_lea.vmem %s2, %s693
      %p695 = scmp.lt.s32.totalorder %s32, 1
      %s696 = scalar_select %p695, %s32, 1
      %s697 = smul.addr %s696, 16
      %s698 = smul.addr %s697, 8
      %s699 = scalar_lea.vmem %s3, %s698
      %p700 = scmp.lt.s32.totalorder %s32, 1
      %s701 = scalar_select %p700, %s32, 1
      %s702 = smul.addr %s701, 2
      %s703 = smul.addr %s702, 8
      %s704 = scalar_lea.vmem %s18, %s703
      %p705 = scmp.lt.s32.totalorder %s32, 1
      %s706 = scalar_select %p705, %s32, 1
      %s707 = smul.addr %s706, 2
      %s708 = smul.addr %s707, 4
      %s709 = scalar_lea.vmem %s19, %s708
      %p710 = scmp.lt.s32.totalorder %s32, 1
      %s711 = scalar_select %p710, %s32, 1
      %s712 = smul.addr %s711, 2
      %s713 = smul.addr %s712, 2
      %s714 = scalar_lea.vmem %s20, %s713
      %v715 = vld [vmem:[%s684] sm:$0xff]
      %v716 = vld [vmem:[%s684 + $0x8] sm:$0xff]
      %v717 = vld [vmem:[%s684 + $0x10] sm:$0xff]
      %v718 = vld [vmem:[%s684 + $0x18] sm:$0xff]
      %v719 = vld [vmem:[%s684 + $0x20] sm:$0xff]
      %v720 = vld [vmem:[%s684 + $0x28] sm:$0xff]
      %v721 = vld [vmem:[%s684 + $0x30] sm:$0xff]
      %v722 = vld [vmem:[%s684 + $0x38] sm:$0xff]
      %v723 = vld [vmem:[%s4] sm:$0xff]
      %v724 = vld [vmem:[%s4 + $0x8] sm:$0xff]
      %v725 = vld [vmem:[%s4 + $0x10] sm:$0xff]
      %v726 = vld [vmem:[%s4 + $0x18] sm:$0xff]
      %v727 = vld [vmem:[%s4 + $0x20] sm:$0xff]
      %v728 = vld [vmem:[%s4 + $0x28] sm:$0xff]
      %v729 = vld [vmem:[%s4 + $0x30] sm:$0xff]
      %v730 = vld [vmem:[%s4 + $0x38] sm:$0xff]
      %v731 = vld [vmem:[%s4 + $0x40] sm:$0xff]
      %v732 = vld [vmem:[%s4 + $0x48] sm:$0xff]
      %v733 = vld [vmem:[%s4 + $0x50] sm:$0xff]
      %v734 = vld [vmem:[%s4 + $0x58] sm:$0xff]
      %v735 = vld [vmem:[%s4 + $0x60] sm:$0xff]
      %v736 = vld [vmem:[%s4 + $0x68] sm:$0xff]
      %v737 = vld [vmem:[%s4 + $0x70] sm:$0xff]
      %v738 = vld [vmem:[%s4 + $0x78] sm:$0xff]
      %v739 = vld [vmem:[%s4 + $0x80] sm:$0xff]
      %v740 = vld [vmem:[%s4 + $0x88] sm:$0xff]
      %v741 = vld [vmem:[%s4 + $0x90] sm:$0xff]
      %v742 = vld [vmem:[%s4 + $0x98] sm:$0xff]
      %v743 = vld [vmem:[%s4 + $0xa0] sm:$0xff]
      %v744 = vld [vmem:[%s4 + $0xa8] sm:$0xff]
      %v745 = vld [vmem:[%s4 + $0xb0] sm:$0xff]
      %v746 = vld [vmem:[%s4 + $0xb8] sm:$0xff]
      %v747 = vld [vmem:[%s4 + $0xc0] sm:$0xff]
      %v748 = vld [vmem:[%s4 + $0xc8] sm:$0xff]
      %v749 = vld [vmem:[%s4 + $0xd0] sm:$0xff]
      %v750 = vld [vmem:[%s4 + $0xd8] sm:$0xff]
      %v751 = vld [vmem:[%s4 + $0xe0] sm:$0xff]
      %v752 = vld [vmem:[%s4 + $0xe8] sm:$0xff]
      %v753 = vld [vmem:[%s4 + $0xf0] sm:$0xff]
      %v754 = vld [vmem:[%s4 + $0xf8] sm:$0xff]
      %755 = vmatprep.subr.mxu0 %v724
      %756 = vmatpush1.msra.mxu0 %v723
      %757 = vmatprep.subr.mxu0 %v726
      %758 = vmatpush1.msra.mxu0 %v725
      %759 = vmatprep.subr.mxu0 %v728
      %760 = vmatpush1.msra.mxu0 %v727
      %761 = vmatprep.subr.mxu0 %v730
      %762 = vmatpush1.msra.mxu0 %v729
      %763 = vmatprep.subr.mxu0 %v732
      %764 = vmatpush1.msra.mxu0 %v731
      %765 = vmatprep.subr.mxu0 %v734
      %766 = vmatpush1.msra.mxu0 %v733
      %767 = vmatprep.subr.mxu0 %v736
      %768 = vmatpush1.msra.mxu0 %v735
      %769 = vmatprep.subr.mxu0 %v738
      %770 = vmatpush1.msra.mxu0 %v737
      %771 = vmatprep.subr.mxu0 %v740
      %772 = vmatpush1.msra.mxu0 %v739
      %773 = vmatprep.subr.mxu0 %v742
      %774 = vmatpush1.msra.mxu0 %v741
      %775 = vmatprep.subr.mxu0 %v744
      %776 = vmatpush1.msra.mxu0 %v743
      %777 = vmatprep.subr.mxu0 %v746
      %778 = vmatpush1.msra.mxu0 %v745
      %779 = vmatprep.subr.mxu0 %v748
      %780 = vmatpush1.msra.mxu0 %v747
      %781 = vmatprep.subr.mxu0 %v750
      %782 = vmatpush1.msra.mxu0 %v749
      %783 = vmatprep.subr.mxu0 %v752
      %784 = vmatpush1.msra.mxu0 %v751
      %785 = vmatprep.subr.mxu0 %v754
      %786 = vmatpush1.msra.mxu0 %v753
      %787 = vmatprep.subr.mxu0 0.0
      %788 = vmatpush1.msra.mxu0 0.0
      %789 = vmatprep.subr.mxu0 0.0
      %790 = vmatpush1.msra.mxu0 0.0
      %791 = vmatprep.subr.mxu0 0.0
      %792 = vmatpush1.msra.mxu0 0.0
      %793 = vmatprep.subr.mxu0 0.0
      %794 = vmatpush1.msra.mxu0 0.0
      %795 = vmatprep.subr.mxu0 0.0
      %796 = vmatpush1.msra.mxu0 0.0
      %797 = vmatprep.subr.mxu0 0.0
      %798 = vmatpush1.msra.mxu0 0.0
      %799 = vmatprep.subr.mxu0 0.0
      %800 = vmatpush1.msra.mxu0 0.0
      %801 = vmatprep.subr.mxu0 0.0
      %802 = vmatpush1.msra.mxu0 0.0
      %803 = vmatprep.subr.mxu0 0.0
      %804 = vmatpush1.msra.mxu0 0.0
      %805 = vmatprep.subr.mxu0 0.0
      %806 = vmatpush1.msra.mxu0 0.0
      %807 = vmatprep.subr.mxu0 0.0
      %808 = vmatpush1.msra.mxu0 0.0
      %809 = vmatprep.subr.mxu0 0.0
      %810 = vmatpush1.msra.mxu0 0.0
      %811 = vmatprep.subr.mxu0 0.0
      %812 = vmatpush1.msra.mxu0 0.0
      %813 = vmatprep.subr.mxu0 0.0
      %814 = vmatpush1.msra.mxu0 0.0
      %815 = vmatprep.subr.mxu0 0.0
      %816 = vmatpush1.msra.mxu0 0.0
      %817 = vmatprep.subr.mxu0 0.0
      %818 = vmatpush1.msra.mxu0 0.0
      %819 = vmatprep.mubr.f32.mxu0 0.0
      %820 = vmatmul.mubr.f32.gmra.mrb[0].mxu0 %v715
      %v821 = vpop.f32.mrb[0].mxu0
      %v822 = vadd.f32 0.0, %v821
      %v823 = vpop.f32.mrb[0].mxu0
      %v824 = vadd.f32 0.0, %v823
      %825 = vmatprep.mubr.f32.mxu0 0.0
      %826 = vmatmul.mubr.f32.gmra.mrb[0].mxu0 %v716
      %v827 = vpop.f32.mrb[0].mxu0
      %v828 = vadd.f32 0.0, %v827
      %v829 = vpop.f32.mrb[0].mxu0
      %v830 = vadd.f32 0.0, %v829
      %831 = vmatprep.mubr.f32.mxu0 0.0
      %832 = vmatmul.mubr.f32.gmra.mrb[0].mxu0 %v717
      %v833 = vpop.f32.mrb[0].mxu0
      %v834 = vadd.f32 0.0, %v833
      %v835 = vpop.f32.mrb[0].mxu0
      %v836 = vadd.f32 0.0, %v835
      %837 = vmatprep.mubr.f32.mxu0 0.0
      %838 = vmatmul.mubr.f32.gmra.mrb[0].mxu0 %v718
      %v839 = vpop.f32.mrb[0].mxu0
      %v840 = vadd.f32 0.0, %v839
      %v841 = vpop.f32.mrb[0].mxu0
      %v842 = vadd.f32 0.0, %v841
      %843 = vmatprep.mubr.f32.mxu0 0.0
      %844 = vmatmul.mubr.f32.gmra.mrb[0].mxu0 %v719
      %v845 = vpop.f32.mrb[0].mxu0
      %v846 = vadd.f32 0.0, %v845
      %v847 = vpop.f32.mrb[0].mxu0
      %v848 = vadd.f32 0.0, %v847
      %849 = vmatprep.mubr.f32.mxu0 0.0
      %850 = vmatmul.mubr.f32.gmra.mrb[0].mxu0 %v720
      %v851 = vpop.f32.mrb[0].mxu0
      %v852 = vadd.f32 0.0, %v851
      %v853 = vpop.f32.mrb[0].mxu0
      %v854 = vadd.f32 0.0, %v853
      %855 = vmatprep.mubr.f32.mxu0 0.0
      %856 = vmatmul.mubr.f32.gmra.mrb[0].mxu0 %v721
      %v857 = vpop.f32.mrb[0].mxu0
      %v858 = vadd.f32 0.0, %v857
      %v859 = vpop.f32.mrb[0].mxu0
      %v860 = vadd.f32 0.0, %v859
      %861 = vmatprep.mubr.f32.mxu0 0.0
      %862 = vmatmul.mubr.f32.gmra.mrb[0].mxu0 %v722
      %v863 = vpop.f32.mrb[0].mxu0
      %v864 = vadd.f32 0.0, %v863
      %v865 = vpop.f32.mrb[0].mxu0
      %v866 = vadd.f32 0.0, %v865
      %867 = vdwg.mxu0
      %v868 = vld [vmem:[%s5] sm:$0xff]
      %v869 = vld [vmem:[%s5 + $0x8] sm:$0xff]
      %v870 = vld [vmem:[%s5 + $0x10] sm:$0xff]
      %v871 = vld [vmem:[%s5 + $0x18] sm:$0xff]
      %v872 = vld [vmem:[%s5 + $0x20] sm:$0xff]
      %v873 = vld [vmem:[%s5 + $0x28] sm:$0xff]
      %v874 = vld [vmem:[%s689] sm:$0xff]
      %v875 = vld [vmem:[%s689 + $0x8] sm:$0xff]
      %v876 = vld [vmem:[%s689 + $0x10] sm:$0xff]
      %v877 = vld [vmem:[%s689 + $0x18] sm:$0xff]
      %v878 = vld [vmem:[%s689 + $0x20] sm:$0xff]
      %v879 = vld [vmem:[%s689 + $0x28] sm:$0xff]
      %v880 = vld [vmem:[%s689 + $0x30] sm:$0xff]
      %v881 = vld [vmem:[%s689 + $0x38] sm:$0xff]
      %v882 = vld [vmem:[%s689 + $0x40] sm:$0xff]
      %v883 = vld [vmem:[%s689 + $0x48] sm:$0xff]
      %v884 = vld [vmem:[%s689 + $0x50] sm:$0xff]
      %v885 = vld [vmem:[%s689 + $0x58] sm:$0xff]
      %v886 = vld [vmem:[%s689 + $0x60] sm:$0xff]
      %v887 = vld [vmem:[%s689 + $0x68] sm:$0xff]
      %v888 = vld [vmem:[%s689 + $0x70] sm:$0xff]
      %v889 = vld [vmem:[%s689 + $0x78] sm:$0xff]
      %v890 = vld [vmem:[%s6] sm:$0xff]
      %v891 = vld [vmem:[%s6 + $0x8] sm:$0xff]
      %v892 = vld [vmem:[%s6 + $0x10] sm:$0xff]
      %v893 = vld [vmem:[%s6 + $0x18] sm:$0xff]
      %v894 = vld [vmem:[%s6 + $0x20] sm:$0xff]
      %v895 = vld [vmem:[%s6 + $0x28] sm:$0xff]
      %897 = vset.pattern.permute.xlu0 0
      %898 = vperm.xlu0 %897, %v890
      %v899 = vpop.permute.xlu0 %898
      %902 = vset.pattern.permute.xlu0 0
      %903 = vperm.xlu0 %902, %v891
      %v904 = vpop.permute.xlu0 %903
      %907 = vset.pattern.permute.xlu0 0
      %908 = vperm.xlu0 %907, %v892
      %v909 = vpop.permute.xlu0 %908
      %912 = vset.pattern.permute.xlu0 0
      %913 = vperm.xlu0 %912, %v893
      %v914 = vpop.permute.xlu0 %913
      %917 = vset.pattern.permute.xlu0 0
      %918 = vperm.xlu0 %917, %v894
      %v919 = vpop.permute.xlu0 %918
      %922 = vset.pattern.permute.xlu0 0
      %923 = vperm.xlu0 %922, %v895
      %v924 = vpop.permute.xlu0 %923
      %vm926 = vcmask 523264
      %v928 = vsel %vm926, %v868, 0
      %v931 = vsel %vm926, %v869, 0
      %v934 = vsel %vm926, %v870, 0
      %v937 = vsel %vm926, %v871, 0
      %v940 = vsel %vm926, %v872, 0
      %v943 = vsel %vm926, %v873, 0
      %945 = vmatprep.subr.mxu0 %v875
      %946 = vmatpush1.msra.mxu0 %v874
      %947 = vmatprep.subr.mxu0 %v877
      %948 = vmatpush1.msra.mxu0 %v876
      %949 = vmatprep.subr.mxu0 %v879
      %950 = vmatpush1.msra.mxu0 %v878
      %951 = vmatprep.subr.mxu0 %v881
      %952 = vmatpush1.msra.mxu0 %v880
      %953 = vmatprep.subr.mxu0 %v883
      %954 = vmatpush1.msra.mxu0 %v882
      %955 = vmatprep.subr.mxu0 %v885
      %956 = vmatpush1.msra.mxu0 %v884
      %957 = vmatprep.subr.mxu0 %v887
      %958 = vmatpush1.msra.mxu0 %v886
      %959 = vmatprep.subr.mxu0 %v889
      %960 = vmatpush1.msra.mxu0 %v888
      %961 = vmatprep.subr.mxu0 0.0
      %962 = vmatpush1.msra.mxu0 0.0
      %963 = vmatprep.subr.mxu0 0.0
      %964 = vmatpush1.msra.mxu0 0.0
      %965 = vmatprep.subr.mxu0 0.0
      %966 = vmatpush1.msra.mxu0 0.0
      %967 = vmatprep.subr.mxu0 0.0
      %968 = vmatpush1.msra.mxu0 0.0
      %969 = vmatprep.subr.mxu0 0.0
      %970 = vmatpush1.msra.mxu0 0.0
      %971 = vmatprep.subr.mxu0 0.0
      %972 = vmatpush1.msra.mxu0 0.0
      %973 = vmatprep.subr.mxu0 0.0
      %974 = vmatpush1.msra.mxu0 0.0
      %975 = vmatprep.subr.mxu0 0.0
      %976 = vmatpush1.msra.mxu0 0.0
      %977 = vmatprep.subr.mxu0 0.0
      %978 = vmatpush1.msra.mxu0 0.0
      %979 = vmatprep.subr.mxu0 0.0
      %980 = vmatpush1.msra.mxu0 0.0
      %981 = vmatprep.subr.mxu0 0.0
      %982 = vmatpush1.msra.mxu0 0.0
      %983 = vmatprep.subr.mxu0 0.0
      %984 = vmatpush1.msra.mxu0 0.0
      %985 = vmatprep.subr.mxu0 0.0
      %986 = vmatpush1.msra.mxu0 0.0
      %987 = vmatprep.subr.mxu0 0.0
      %988 = vmatpush1.msra.mxu0 0.0
      %989 = vmatprep.subr.mxu0 0.0
      %990 = vmatpush1.msra.mxu0 0.0
      %991 = vmatprep.subr.mxu0 0.0
      %992 = vmatpush1.msra.mxu0 0.0
      %993 = vmatprep.subr.mxu0 0.0
      %994 = vmatpush1.msra.mxu0 0.0
      %995 = vmatprep.subr.mxu0 0.0
      %996 = vmatpush1.msra.mxu0 0.0
      %997 = vmatprep.subr.mxu0 0.0
      %998 = vmatpush1.msra.mxu0 0.0
      %999 = vmatprep.subr.mxu0 0.0
      %1000 = vmatpush1.msra.mxu0 0.0
      %1001 = vmatprep.subr.mxu0 0.0
      %1002 = vmatpush1.msra.mxu0 0.0
      %1003 = vmatprep.subr.mxu0 0.0
      %1004 = vmatpush1.msra.mxu0 0.0
      %1005 = vmatprep.subr.mxu0 0.0
      %1006 = vmatpush1.msra.mxu0 0.0
      %1007 = vmatprep.subr.mxu0 0.0
      %1008 = vmatpush1.msra.mxu0 0.0
      %1009 = vmatprep.mubr.f32.mxu0 0.0
      %1010 = vmatmul.mubr.f32.gmra.mrb[0].mxu0 %v928
      %v1011 = vpop.f32.mrb[0].mxu0
      %v1012 = vadd.f32 %v899, %v1011
      %v1013 = vpop.f32.mrb[0].mxu0
      %v1014 = vadd.f32 %v899, %v1013
      %1015 = vmatprep.mubr.f32.mxu0 0.0
      %1016 = vmatmul.mubr.f32.gmra.mrb[0].mxu0 %v931
      %v1017 = vpop.f32.mrb[0].mxu0
      %v1018 = vadd.f32 %v904, %v1017
      %v1019 = vpop.f32.mrb[0].mxu0
      %v1020 = vadd.f32 %v904, %v1019
      %1021 = vmatprep.mubr.f32.mxu0 0.0
      %1022 = vmatmul.mubr.f32.gmra.mrb[0].mxu0 %v934
      %v1023 = vpop.f32.mrb[0].mxu0
      %v1024 = vadd.f32 %v909, %v1023
      %v1025 = vpop.f32.mrb[0].mxu0
      %v1026 = vadd.f32 %v909, %v1025
      %1027 = vmatprep.mubr.f32.mxu0 0.0
      %1028 = vmatmul.mubr.f32.gmra.mrb[0].mxu0 %v937
      %v1029 = vpop.f32.mrb[0].mxu0
      %v1030 = vadd.f32 %v914, %v1029
      %v1031 = vpop.f32.mrb[0].mxu0
      %v1032 = vadd.f32 %v914, %v1031
      %1033 = vmatprep.mubr.f32.mxu0 0.0
      %1034 = vmatmul.mubr.f32.gmra.mrb[0].mxu0 %v940
      %v1035 = vpop.f32.mrb[0].mxu0
      %v1036 = vadd.f32 %v919, %v1035
      %v1037 = vpop.f32.mrb[0].mxu0
      %v1038 = vadd.f32 %v919, %v1037
      %1039 = vmatprep.mubr.f32.mxu0 0.0
      %1040 = vmatmul.mubr.f32.gmra.mrb[0].mxu0 %v943
      %v1041 = vpop.f32.mrb[0].mxu0
      %v1042 = vadd.f32 %v924, %v1041
      %v1043 = vpop.f32.mrb[0].mxu0
      %v1044 = vadd.f32 %v924, %v1043
      %1045 = vdwg.mxu0
      %v1046 = vmax.f32 %v1012, 0.0
      %v1047 = vmax.f32 %v1014, 0.0
      %v1048 = vmax.f32 %v1018, 0.0
      %v1049 = vmax.f32 %v1020, 0.0
      %v1050 = vmax.f32 %v1024, 0.0
      %v1051 = vmax.f32 %v1026, 0.0
      %v1052 = vmax.f32 %v1030, 0.0
      %v1053 = vmax.f32 %v1032, 0.0
      %v1054 = vmax.f32 %v1036, 0.0
      %v1055 = vmax.f32 %v1038, 0.0
      %v1056 = vmax.f32 %v1042, 0.0
      %v1057 = vmax.f32 %v1044, 0.0
      %v1058 = vld [vmem:[%s7] sm:$0xff]
      %v1059 = vld [vmem:[%s7 + $0x8] sm:$0xff]
      %v1060 = vld [vmem:[%s7 + $0x10] sm:$0xff]
      %v1061 = vld [vmem:[%s7 + $0x18] sm:$0xff]
      %v1062 = vld [vmem:[%s7 + $0x20] sm:$0xff]
      %v1063 = vld [vmem:[%s7 + $0x28] sm:$0xff]
      %v1064 = vld [vmem:[%s7 + $0x30] sm:$0xff]
      %v1065 = vld [vmem:[%s7 + $0x38] sm:$0xff]
      %v1066 = vld [vmem:[%s8] sm:$0xff]
      %v1067 = vld [vmem:[%s8 + $0x8] sm:$0xff]
      %v1068 = vld [vmem:[%s8 + $0x10] sm:$0xff]
      %v1069 = vld [vmem:[%s8 + $0x18] sm:$0xff]
      %v1070 = vld [vmem:[%s8 + $0x20] sm:$0xff]
      %v1071 = vld [vmem:[%s8 + $0x28] sm:$0xff]
      %v1072 = vld [vmem:[%s8 + $0x30] sm:$0xff]
      %v1073 = vld [vmem:[%s8 + $0x38] sm:$0xff]
      %vm1074 = vcmask 392192
      %v1076 = vsel %vm1074, %v1066, 0
      %v1079 = vsel %vm1074, %v1067, 0
      %v1082 = vsel %vm1074, %v1068, 0
      %v1085 = vsel %vm1074, %v1069, 0
      %v1088 = vsel %vm1074, %v1070, 0
      %v1091 = vsel %vm1074, %v1071, 0
      %v1094 = vsel %vm1074, %v1072, 0
      %v1097 = vsel %vm1074, %v1073, 0
      %1099 = vmatprep.subr.mxu0 %v1047
      %1100 = vmatpush1.msra.mxu0 %v1046
      %1101 = vmatprep.subr.mxu0 %v1049
      %1102 = vmatpush1.msra.mxu0 %v1048
      %1103 = vmatprep.subr.mxu0 %v1051
      %1104 = vmatpush1.msra.mxu0 %v1050
      %1105 = vmatprep.subr.mxu0 %v1053
      %1106 = vmatpush1.msra.mxu0 %v1052
      %1107 = vmatprep.subr.mxu0 %v1055
      %1108 = vmatpush1.msra.mxu0 %v1054
      %1109 = vmatprep.subr.mxu0 %v1057
      %1110 = vmatpush1.msra.mxu0 %v1056
      %1111 = vmatprep.subr.mxu0 0.0
      %1112 = vmatpush1.msra.mxu0 0.0
      %1113 = vmatprep.subr.mxu0 0.0
      %1114 = vmatpush1.msra.mxu0 0.0
      %1115 = vmatprep.subr.mxu0 0.0
      %1116 = vmatpush1.msra.mxu0 0.0
      %1117 = vmatprep.subr.mxu0 0.0
      %1118 = vmatpush1.msra.mxu0 0.0
      %1119 = vmatprep.subr.mxu0 0.0
      %1120 = vmatpush1.msra.mxu0 0.0
      %1121 = vmatprep.subr.mxu0 0.0
      %1122 = vmatpush1.msra.mxu0 0.0
      %1123 = vmatprep.subr.mxu0 0.0
      %1124 = vmatpush1.msra.mxu0 0.0
      %1125 = vmatprep.subr.mxu0 0.0
      %1126 = vmatpush1.msra.mxu0 0.0
      %1127 = vmatprep.subr.mxu0 0.0
      %1128 = vmatpush1.msra.mxu0 0.0
      %1129 = vmatprep.subr.mxu0 0.0
      %1130 = vmatpush1.msra.mxu0 0.0
      %1131 = vmatprep.subr.mxu0 0.0
      %1132 = vmatpush1.msra.mxu0 0.0
      %1133 = vmatprep.subr.mxu0 0.0
      %1134 = vmatpush1.msra.mxu0 0.0
      %1135 = vmatprep.subr.mxu0 0.0
      %1136 = vmatpush1.msra.mxu0 0.0
      %1137 = vmatprep.subr.mxu0 0.0
      %1138 = vmatpush1.msra.mxu0 0.0
      %1139 = vmatprep.subr.mxu0 0.0
      %1140 = vmatpush1.msra.mxu0 0.0
      %1141 = vmatprep.subr.mxu0 0.0
      %1142 = vmatpush1.msra.mxu0 0.0
      %1143 = vmatprep.subr.mxu0 0.0
      %1144 = vmatpush1.msra.mxu0 0.0
      %1145 = vmatprep.subr.mxu0 0.0
      %1146 = vmatpush1.msra.mxu0 0.0
      %1147 = vmatprep.subr.mxu0 0.0
      %1148 = vmatpush1.msra.mxu0 0.0
      %1149 = vmatprep.subr.mxu0 0.0
      %1150 = vmatpush1.msra.mxu0 0.0
      %1151 = vmatprep.subr.mxu0 0.0
      %1152 = vmatpush1.msra.mxu0 0.0
      %1153 = vmatprep.subr.mxu0 0.0
      %1154 = vmatpush1.msra.mxu0 0.0
      %1155 = vmatprep.subr.mxu0 0.0
      %1156 = vmatpush1.msra.mxu0 0.0
      %1157 = vmatprep.subr.mxu0 0.0
      %1158 = vmatpush1.msra.mxu0 0.0
      %1159 = vmatprep.subr.mxu0 0.0
      %1160 = vmatpush1.msra.mxu0 0.0
      %1161 = vmatprep.subr.mxu0 0.0
      %1162 = vmatpush1.msra.mxu0 0.0
      %1163 = vmatprep.mubr.f32.mxu0 0.0
      %1164 = vmatmul.mubr.f32.gmra.mrb[0].mxu0 %v1076
      %v1165 = vpop.f32.mrb[0].mxu0
      %v1166 = vadd.f32 0.0, %v1165
      %v1167 = vpop.f32.mrb[0].mxu0
      %v1168 = vadd.f32 0.0, %v1167
      %1169 = vmatprep.mubr.f32.mxu0 0.0
      %1170 = vmatmul.mubr.f32.gmra.mrb[0].mxu0 %v1079
      %v1171 = vpop.f32.mrb[0].mxu0
      %v1172 = vadd.f32 0.0, %v1171
      %v1173 = vpop.f32.mrb[0].mxu0
      %v1174 = vadd.f32 0.0, %v1173
      %1175 = vmatprep.mubr.f32.mxu0 0.0
      %1176 = vmatmul.mubr.f32.gmra.mrb[0].mxu0 %v1082
      %v1177 = vpop.f32.mrb[0].mxu0
      %v1178 = vadd.f32 0.0, %v1177
      %v1179 = vpop.f32.mrb[0].mxu0
      %v1180 = vadd.f32 0.0, %v1179
      %1181 = vmatprep.mubr.f32.mxu0 0.0
      %1182 = vmatmul.mubr.f32.gmra.mrb[0].mxu0 %v1085
      %v1183 = vpop.f32.mrb[0].mxu0
      %v1184 = vadd.f32 0.0, %v1183
      %v1185 = vpop.f32.mrb[0].mxu0
      %v1186 = vadd.f32 0.0, %v1185
      %1187 = vmatprep.mubr.f32.mxu0 0.0
      %1188 = vmatmul.mubr.f32.gmra.mrb[0].mxu0 %v1088
      %v1189 = vpop.f32.mrb[0].mxu0
      %v1190 = vadd.f32 0.0, %v1189
      %v1191 = vpop.f32.mrb[0].mxu0
      %v1192 = vadd.f32 0.0, %v1191
      %1193 = vmatprep.mubr.f32.mxu0 0.0
      %1194 = vmatmul.mubr.f32.gmra.mrb[0].mxu0 %v1091
      %v1195 = vpop.f32.mrb[0].mxu0
      %v1196 = vadd.f32 0.0, %v1195
      %v1197 = vpop.f32.mrb[0].mxu0
      %v1198 = vadd.f32 0.0, %v1197
      %1199 = vmatprep.mubr.f32.mxu0 0.0
      %1200 = vmatmul.mubr.f32.gmra.mrb[0].mxu0 %v1094
      %v1201 = vpop.f32.mrb[0].mxu0
      %v1202 = vadd.f32 0.0, %v1201
      %v1203 = vpop.f32.mrb[0].mxu0
      %v1204 = vadd.f32 0.0, %v1203
      %1205 = vmatprep.mubr.f32.mxu0 0.0
      %1206 = vmatmul.mubr.f32.gmra.mrb[0].mxu0 %v1097
      %v1207 = vpop.f32.mrb[0].mxu0
      %v1208 = vadd.f32 0.0, %v1207
      %v1209 = vpop.f32.mrb[0].mxu0
      %v1210 = vadd.f32 0.0, %v1209
      %1211 = vdwg.mxu0
      %v1213 = vsel %vm926, %v1058, 0
      %v1216 = vsel %vm926, %v1059, 0
      %v1219 = vsel %vm926, %v1060, 0
      %v1222 = vsel %vm926, %v1061, 0
      %v1225 = vsel %vm926, %v1062, 0
      %v1228 = vsel %vm926, %v1063, 0
      %v1231 = vsel %vm926, %v1064, 0
      %v1234 = vsel %vm926, %v1065, 0
      %1236 = vmatprep.subr.mxu0 %v824
      %1237 = vmatpush1.msra.mxu0 %v822
      %1238 = vmatprep.subr.mxu0 %v830
      %1239 = vmatpush1.msra.mxu0 %v828
      %1240 = vmatprep.subr.mxu0 %v836
      %1241 = vmatpush1.msra.mxu0 %v834
      %1242 = vmatprep.subr.mxu0 %v842
      %1243 = vmatpush1.msra.mxu0 %v840
      %1244 = vmatprep.subr.mxu0 %v848
      %1245 = vmatpush1.msra.mxu0 %v846
      %1246 = vmatprep.subr.mxu0 %v854
      %1247 = vmatpush1.msra.mxu0 %v852
      %1248 = vmatprep.subr.mxu0 %v860
      %1249 = vmatpush1.msra.mxu0 %v858
      %1250 = vmatprep.subr.mxu0 %v866
      %1251 = vmatpush1.msra.mxu0 %v864
      %1252 = vmatprep.subr.mxu0 0.0
      %1253 = vmatpush1.msra.mxu0 0.0
      %1254 = vmatprep.subr.mxu0 0.0
      %1255 = vmatpush1.msra.mxu0 0.0
      %1256 = vmatprep.subr.mxu0 0.0
      %1257 = vmatpush1.msra.mxu0 0.0
      %1258 = vmatprep.subr.mxu0 0.0
      %1259 = vmatpush1.msra.mxu0 0.0
      %1260 = vmatprep.subr.mxu0 0.0
      %1261 = vmatpush1.msra.mxu0 0.0
      %1262 = vmatprep.subr.mxu0 0.0
      %1263 = vmatpush1.msra.mxu0 0.0
      %1264 = vmatprep.subr.mxu0 0.0
      %1265 = vmatpush1.msra.mxu0 0.0
      %1266 = vmatprep.subr.mxu0 0.0
      %1267 = vmatpush1.msra.mxu0 0.0
      %1268 = vmatprep.subr.mxu0 0.0
      %1269 = vmatpush1.msra.mxu0 0.0
      %1270 = vmatprep.subr.mxu0 0.0
      %1271 = vmatpush1.msra.mxu0 0.0
      %1272 = vmatprep.subr.mxu0 0.0
      %1273 = vmatpush1.msra.mxu0 0.0
      %1274 = vmatprep.subr.mxu0 0.0
      %1275 = vmatpush1.msra.mxu0 0.0
      %1276 = vmatprep.subr.mxu0 0.0
      %1277 = vmatpush1.msra.mxu0 0.0
      %1278 = vmatprep.subr.mxu0 0.0
      %1279 = vmatpush1.msra.mxu0 0.0
      %1280 = vmatprep.subr.mxu0 0.0
      %1281 = vmatpush1.msra.mxu0 0.0
      %1282 = vmatprep.subr.mxu0 0.0
      %1283 = vmatpush1.msra.mxu0 0.0
      %1284 = vmatprep.subr.mxu0 0.0
      %1285 = vmatpush1.msra.mxu0 0.0
      %1286 = vmatprep.subr.mxu0 0.0
      %1287 = vmatpush1.msra.mxu0 0.0
      %1288 = vmatprep.subr.mxu0 0.0
      %1289 = vmatpush1.msra.mxu0 0.0
      %1290 = vmatprep.subr.mxu0 0.0
      %1291 = vmatpush1.msra.mxu0 0.0
      %1292 = vmatprep.subr.mxu0 0.0
      %1293 = vmatpush1.msra.mxu0 0.0
      %1294 = vmatprep.subr.mxu0 0.0
      %1295 = vmatpush1.msra.mxu0 0.0
      %1296 = vmatprep.subr.mxu0 0.0
      %1297 = vmatpush1.msra.mxu0 0.0
      %1298 = vmatprep.subr.mxu0 0.0
      %1299 = vmatpush1.msra.mxu0 0.0
      %1300 = vmatprep.mubr.f32.mxu0 0.0
      %1301 = vmatmul.mubr.f32.gmra.mrb[0].mxu0 %v1213
      %v1302 = vpop.f32.mrb[0].mxu0
      %v1303 = vadd.f32 %v1166, %v1302
      %v1304 = vpop.f32.mrb[0].mxu0
      %v1305 = vadd.f32 %v1168, %v1304
      %1306 = vmatprep.mubr.f32.mxu0 0.0
      %1307 = vmatmul.mubr.f32.gmra.mrb[0].mxu0 %v1216
      %v1308 = vpop.f32.mrb[0].mxu0
      %v1309 = vadd.f32 %v1172, %v1308
      %v1310 = vpop.f32.mrb[0].mxu0
      %v1311 = vadd.f32 %v1174, %v1310
      %1312 = vmatprep.mubr.f32.mxu0 0.0
      %1313 = vmatmul.mubr.f32.gmra.mrb[0].mxu0 %v1219
      %v1314 = vpop.f32.mrb[0].mxu0
      %v1315 = vadd.f32 %v1178, %v1314
      %v1316 = vpop.f32.mrb[0].mxu0
      %v1317 = vadd.f32 %v1180, %v1316
      %1318 = vmatprep.mubr.f32.mxu0 0.0
      %1319 = vmatmul.mubr.f32.gmra.mrb[0].mxu0 %v1222
      %v1320 = vpop.f32.mrb[0].mxu0
      %v1321 = vadd.f32 %v1184, %v1320
      %v1322 = vpop.f32.mrb[0].mxu0
      %v1323 = vadd.f32 %v1186, %v1322
      %1324 = vmatprep.mubr.f32.mxu0 0.0
      %1325 = vmatmul.mubr.f32.gmra.mrb[0].mxu0 %v1225
      %v1326 = vpop.f32.mrb[0].mxu0
      %v1327 = vadd.f32 %v1190, %v1326
      %v1328 = vpop.f32.mrb[0].mxu0
      %v1329 = vadd.f32 %v1192, %v1328
      %1330 = vmatprep.mubr.f32.mxu0 0.0
      %1331 = vmatmul.mubr.f32.gmra.mrb[0].mxu0 %v1228
      %v1332 = vpop.f32.mrb[0].mxu0
      %v1333 = vadd.f32 %v1196, %v1332
      %v1334 = vpop.f32.mrb[0].mxu0
      %v1335 = vadd.f32 %v1198, %v1334
      %1336 = vmatprep.mubr.f32.mxu0 0.0
      %1337 = vmatmul.mubr.f32.gmra.mrb[0].mxu0 %v1231
      %v1338 = vpop.f32.mrb[0].mxu0
      %v1339 = vadd.f32 %v1202, %v1338
      %v1340 = vpop.f32.mrb[0].mxu0
      %v1341 = vadd.f32 %v1204, %v1340
      %1342 = vmatprep.mubr.f32.mxu0 0.0
      %1343 = vmatmul.mubr.f32.gmra.mrb[0].mxu0 %v1234
      %v1344 = vpop.f32.mrb[0].mxu0
      %v1345 = vadd.f32 %v1208, %v1344
      %v1346 = vpop.f32.mrb[0].mxu0
      %v1347 = vadd.f32 %v1210, %v1346
      %1348 = vdwg.mxu0
      %v1349 = vld [vmem:[%s9] sm:$0xff]
      %v1350 = vld [vmem:[%s9 + $0x8] sm:$0xff]
      %v1351 = vld [vmem:[%s9 + $0x10] sm:$0xff]
      %v1352 = vld [vmem:[%s9 + $0x18] sm:$0xff]
      %v1353 = vld [vmem:[%s9 + $0x20] sm:$0xff]
      %v1354 = vld [vmem:[%s9 + $0x28] sm:$0xff]
      %v1355 = vld [vmem:[%s9 + $0x30] sm:$0xff]
      %v1356 = vld [vmem:[%s9 + $0x38] sm:$0xff]
      %1358 = vset.pattern.permute.xlu0 0
      %1359 = vperm.xlu0 %1358, %v1349
      %v1360 = vpop.permute.xlu0 %1359
      %1363 = vset.pattern.permute.xlu0 0
      %1364 = vperm.xlu0 %1363, %v1350
      %v1365 = vpop.permute.xlu0 %1364
      %1368 = vset.pattern.permute.xlu0 0
      %1369 = vperm.xlu0 %1368, %v1351
      %v1370 = vpop.permute.xlu0 %1369
      %1373 = vset.pattern.permute.xlu0 0
      %1374 = vperm.xlu0 %1373, %v1352
      %v1375 = vpop.permute.xlu0 %1374
      %1378 = vset.pattern.permute.xlu0 0
      %1379 = vperm.xlu0 %1378, %v1353
      %v1380 = vpop.permute.xlu0 %1379
      %1383 = vset.pattern.permute.xlu0 0
      %1384 = vperm.xlu0 %1383, %v1354
      %v1385 = vpop.permute.xlu0 %1384
      %1388 = vset.pattern.permute.xlu0 0
      %1389 = vperm.xlu0 %1388, %v1355
      %v1390 = vpop.permute.xlu0 %1389
      %1393 = vset.pattern.permute.xlu0 0
      %1394 = vperm.xlu0 %1393, %v1356
      %v1395 = vpop.permute.xlu0 %1394
      %v1397 = vadd.f32 %v1303, %v1360
      %v1398 = vadd.f32 %v1305, %v1360
      %v1399 = vadd.f32 %v1309, %v1365
      %v1400 = vadd.f32 %v1311, %v1365
      %v1401 = vadd.f32 %v1315, %v1370
      %v1402 = vadd.f32 %v1317, %v1370
      %v1403 = vadd.f32 %v1321, %v1375
      %v1404 = vadd.f32 %v1323, %v1375
      %v1405 = vadd.f32 %v1327, %v1380
      %v1406 = vadd.f32 %v1329, %v1380
      %v1407 = vadd.f32 %v1333, %v1385
      %v1408 = vadd.f32 %v1335, %v1385
      %v1409 = vadd.f32 %v1339, %v1390
      %v1410 = vadd.f32 %v1341, %v1390
      %v1411 = vadd.f32 %v1345, %v1395
      %v1412 = vadd.f32 %v1347, %v1395
      %v1413 = vmax.f32 %v1397, 0.0
      %v1414 = vmax.f32 %v1398, 0.0
      %v1415 = vmax.f32 %v1399, 0.0
      %v1416 = vmax.f32 %v1400, 0.0
      %v1417 = vmax.f32 %v1401, 0.0
      %v1418 = vmax.f32 %v1402, 0.0
      %v1419 = vmax.f32 %v1403, 0.0
      %v1420 = vmax.f32 %v1404, 0.0
      %v1421 = vmax.f32 %v1405, 0.0
      %v1422 = vmax.f32 %v1406, 0.0
      %v1423 = vmax.f32 %v1407, 0.0
      %v1424 = vmax.f32 %v1408, 0.0
      %v1425 = vmax.f32 %v1409, 0.0
      %v1426 = vmax.f32 %v1410, 0.0
      %v1427 = vmax.f32 %v1411, 0.0
      %v1428 = vmax.f32 %v1412, 0.0
      %v1429 = vld [vmem:[%s10] sm:$0xff]
      %v1430 = vld [vmem:[%s10 + $0x8] sm:$0xff]
      %v1431 = vld [vmem:[%s10 + $0x10] sm:$0xff]
      %v1432 = vld [vmem:[%s10 + $0x18] sm:$0xff]
      %v1433 = vld [vmem:[%s10 + $0x20] sm:$0xff]
      %v1434 = vld [vmem:[%s10 + $0x28] sm:$0xff]
      %v1435 = vld [vmem:[%s10 + $0x30] sm:$0xff]
      %v1436 = vld [vmem:[%s10 + $0x38] sm:$0xff]
      %v1437 = vld [vmem:[%s11] sm:$0xff]
      %v1438 = vld [vmem:[%s11 + $0x8] sm:$0xff]
      %v1439 = vld [vmem:[%s11 + $0x10] sm:$0xff]
      %v1440 = vld [vmem:[%s11 + $0x18] sm:$0xff]
      %v1441 = vld [vmem:[%s11 + $0x20] sm:$0xff]
      %v1442 = vld [vmem:[%s11 + $0x28] sm:$0xff]
      %v1443 = vld [vmem:[%s11 + $0x30] sm:$0xff]
      %v1444 = vld [vmem:[%s11 + $0x38] sm:$0xff]
      %1446 = vset.pattern.permute.xlu0 0
      %1447 = vperm.xlu0 %1446, %v1437
      %v1448 = vpop.permute.xlu0 %1447
      %1451 = vset.pattern.permute.xlu0 0
      %1452 = vperm.xlu0 %1451, %v1438
      %v1453 = vpop.permute.xlu0 %1452
      %1456 = vset.pattern.permute.xlu0 0
      %1457 = vperm.xlu0 %1456, %v1439
      %v1458 = vpop.permute.xlu0 %1457
      %1461 = vset.pattern.permute.xlu0 0
      %1462 = vperm.xlu0 %1461, %v1440
      %v1463 = vpop.permute.xlu0 %1462
      %1466 = vset.pattern.permute.xlu0 0
      %1467 = vperm.xlu0 %1466, %v1441
      %v1468 = vpop.permute.xlu0 %1467
      %1471 = vset.pattern.permute.xlu0 0
      %1472 = vperm.xlu0 %1471, %v1442
      %v1473 = vpop.permute.xlu0 %1472
      %1476 = vset.pattern.permute.xlu0 0
      %1477 = vperm.xlu0 %1476, %v1443
      %v1478 = vpop.permute.xlu0 %1477
      %1481 = vset.pattern.permute.xlu0 0
      %1482 = vperm.xlu0 %1481, %v1444
      %v1483 = vpop.permute.xlu0 %1482
      %v1486 = vsel %vm926, %v1429, 0
      %v1489 = vsel %vm926, %v1430, 0
      %v1492 = vsel %vm926, %v1431, 0
      %v1495 = vsel %vm926, %v1432, 0
      %v1498 = vsel %vm926, %v1433, 0
      %v1501 = vsel %vm926, %v1434, 0
      %v1504 = vsel %vm926, %v1435, 0
      %v1507 = vsel %vm926, %v1436, 0
      %1509 = vmatprep.subr.mxu0 %v1414
      %1510 = vmatpush1.msra.mxu0 %v1413
      %1511 = vmatprep.subr.mxu0 %v1416
      %1512 = vmatpush1.msra.mxu0 %v1415
      %1513 = vmatprep.subr.mxu0 %v1418
      %1514 = vmatpush1.msra.mxu0 %v1417
      %1515 = vmatprep.subr.mxu0 %v1420
      %1516 = vmatpush1.msra.mxu0 %v1419
      %1517 = vmatprep.subr.mxu0 %v1422
      %1518 = vmatpush1.msra.mxu0 %v1421
      %1519 = vmatprep.subr.mxu0 %v1424
      %1520 = vmatpush1.msra.mxu0 %v1423
      %1521 = vmatprep.subr.mxu0 %v1426
      %1522 = vmatpush1.msra.mxu0 %v1425
      %1523 = vmatprep.subr.mxu0 %v1428
      %1524 = vmatpush1.msra.mxu0 %v1427
      %1525 = vmatprep.subr.mxu0 0.0
      %1526 = vmatpush1.msra.mxu0 0.0
      %1527 = vmatprep.subr.mxu0 0.0
      %1528 = vmatpush1.msra.mxu0 0.0
      %1529 = vmatprep.subr.mxu0 0.0
      %1530 = vmatpush1.msra.mxu0 0.0
      %1531 = vmatprep.subr.mxu0 0.0
      %1532 = vmatpush1.msra.mxu0 0.0
      %1533 = vmatprep.subr.mxu0 0.0
      %1534 = vmatpush1.msra.mxu0 0.0
      %1535 = vmatprep.subr.mxu0 0.0
      %1536 = vmatpush1.msra.mxu0 0.0
      %1537 = vmatprep.subr.mxu0 0.0
      %1538 = vmatpush1.msra.mxu0 0.0
      %1539 = vmatprep.subr.mxu0 0.0
      %1540 = vmatpush1.msra.mxu0 0.0
      %1541 = vmatprep.subr.mxu0 0.0
      %1542 = vmatpush1.msra.mxu0 0.0
      %1543 = vmatprep.subr.mxu0 0.0
      %1544 = vmatpush1.msra.mxu0 0.0
      %1545 = vmatprep.subr.mxu0 0.0
      %1546 = vmatpush1.msra.mxu0 0.0
      %1547 = vmatprep.subr.mxu0 0.0
      %1548 = vmatpush1.msra.mxu0 0.0
      %1549 = vmatprep.subr.mxu0 0.0
      %1550 = vmatpush1.msra.mxu0 0.0
      %1551 = vmatprep.subr.mxu0 0.0
      %1552 = vmatpush1.msra.mxu0 0.0
      %1553 = vmatprep.subr.mxu0 0.0
      %1554 = vmatpush1.msra.mxu0 0.0
      %1555 = vmatprep.subr.mxu0 0.0
      %1556 = vmatpush1.msra.mxu0 0.0
      %1557 = vmatprep.subr.mxu0 0.0
      %1558 = vmatpush1.msra.mxu0 0.0
      %1559 = vmatprep.subr.mxu0 0.0
      %1560 = vmatpush1.msra.mxu0 0.0
      %1561 = vmatprep.subr.mxu0 0.0
      %1562 = vmatpush1.msra.mxu0 0.0
      %1563 = vmatprep.subr.mxu0 0.0
      %1564 = vmatpush1.msra.mxu0 0.0
      %1565 = vmatprep.subr.mxu0 0.0
      %1566 = vmatpush1.msra.mxu0 0.0
      %1567 = vmatprep.subr.mxu0 0.0
      %1568 = vmatpush1.msra.mxu0 0.0
      %1569 = vmatprep.subr.mxu0 0.0
      %1570 = vmatpush1.msra.mxu0 0.0
      %1571 = vmatprep.subr.mxu0 0.0
      %1572 = vmatpush1.msra.mxu0 0.0
      %1573 = vmatprep.mubr.f32.mxu0 0.0
      %1574 = vmatmul.mubr.f32.gmra.mrb[0].mxu0 %v1486
      %v1575 = vpop.f32.mrb[0].mxu0
      %v1576 = vadd.f32 %v1448, %v1575
      %v1577 = vpop.f32.mrb[0].mxu0
      %v1578 = vadd.f32 %v1448, %v1577
      %1579 = vmatprep.mubr.f32.mxu0 0.0
      %1580 = vmatmul.mubr.f32.gmra.mrb[0].mxu0 %v1489
      %v1581 = vpop.f32.mrb[0].mxu0
      %v1582 = vadd.f32 %v1453, %v1581
      %v1583 = vpop.f32.mrb[0].mxu0
      %v1584 = vadd.f32 %v1453, %v1583
      %1585 = vmatprep.mubr.f32.mxu0 0.0
      %1586 = vmatmul.mubr.f32.gmra.mrb[0].mxu0 %v1492
      %v1587 = vpop.f32.mrb[0].mxu0
      %v1588 = vadd.f32 %v1458, %v1587
      %v1589 = vpop.f32.mrb[0].mxu0
      %v1590 = vadd.f32 %v1458, %v1589
      %1591 = vmatprep.mubr.f32.mxu0 0.0
      %1592 = vmatmul.mubr.f32.gmra.mrb[0].mxu0 %v1495
      %v1593 = vpop.f32.mrb[0].mxu0
      %v1594 = vadd.f32 %v1463, %v1593
      %v1595 = vpop.f32.mrb[0].mxu0
      %v1596 = vadd.f32 %v1463, %v1595
      %1597 = vmatprep.mubr.f32.mxu0 0.0
      %1598 = vmatmul.mubr.f32.gmra.mrb[0].mxu0 %v1498
      %v1599 = vpop.f32.mrb[0].mxu0
      %v1600 = vadd.f32 %v1468, %v1599
      %v1601 = vpop.f32.mrb[0].mxu0
      %v1602 = vadd.f32 %v1468, %v1601
      %1603 = vmatprep.mubr.f32.mxu0 0.0
      %1604 = vmatmul.mubr.f32.gmra.mrb[0].mxu0 %v1501
      %v1605 = vpop.f32.mrb[0].mxu0
      %v1606 = vadd.f32 %v1473, %v1605
      %v1607 = vpop.f32.mrb[0].mxu0
      %v1608 = vadd.f32 %v1473, %v1607
      %1609 = vmatprep.mubr.f32.mxu0 0.0
      %1610 = vmatmul.mubr.f32.gmra.mrb[0].mxu0 %v1504
      %v1611 = vpop.f32.mrb[0].mxu0
      %v1612 = vadd.f32 %v1478, %v1611
      %v1613 = vpop.f32.mrb[0].mxu0
      %v1614 = vadd.f32 %v1478, %v1613
      %1615 = vmatprep.mubr.f32.mxu0 0.0
      %1616 = vmatmul.mubr.f32.gmra.mrb[0].mxu0 %v1507
      %v1617 = vpop.f32.mrb[0].mxu0
      %v1618 = vadd.f32 %v1483, %v1617
      %v1619 = vpop.f32.mrb[0].mxu0
      %v1620 = vadd.f32 %v1483, %v1619
      %1621 = vdwg.mxu0
      %v1622 = vmax.f32 %v1576, 0.0
      %v1623 = vmax.f32 %v1578, 0.0
      %v1624 = vmax.f32 %v1582, 0.0
      %v1625 = vmax.f32 %v1584, 0.0
      %v1626 = vmax.f32 %v1588, 0.0
      %v1627 = vmax.f32 %v1590, 0.0
      %v1628 = vmax.f32 %v1594, 0.0
      %v1629 = vmax.f32 %v1596, 0.0
      %v1630 = vmax.f32 %v1600, 0.0
      %v1631 = vmax.f32 %v1602, 0.0
      %v1632 = vmax.f32 %v1606, 0.0
      %v1633 = vmax.f32 %v1608, 0.0
      %v1634 = vmax.f32 %v1612, 0.0
      %v1635 = vmax.f32 %v1614, 0.0
      %v1636 = vmax.f32 %v1618, 0.0
      %v1637 = vmax.f32 %v1620, 0.0
      %v1638 = vld [vmem:[%s12] sm:$0x7f]
      %v1639 = vld [vmem:[%s13] sm:$0x7f]
      %1641 = vset.pattern.permute.xlu0 0
      %1642 = vperm.xlu0 %1641, %v1639
      %v1643 = vpop.permute.xlu0 %1642
      %v1646 = vsel %vm926, %v1638, 0
      %1648 = vmatprep.subr.mxu0 %v1623
      %1649 = vmatpush1.msra.mxu0 %v1622
      %1650 = vmatprep.subr.mxu0 %v1625
      %1651 = vmatpush1.msra.mxu0 %v1624
      %1652 = vmatprep.subr.mxu0 %v1627
      %1653 = vmatpush1.msra.mxu0 %v1626
      %1654 = vmatprep.subr.mxu0 %v1629
      %1655 = vmatpush1.msra.mxu0 %v1628
      %1656 = vmatprep.subr.mxu0 %v1631
      %1657 = vmatpush1.msra.mxu0 %v1630
      %1658 = vmatprep.subr.mxu0 %v1633
      %1659 = vmatpush1.msra.mxu0 %v1632
      %1660 = vmatprep.subr.mxu0 %v1635
      %1661 = vmatpush1.msra.mxu0 %v1634
      %1662 = vmatprep.subr.mxu0 %v1637
      %1663 = vmatpush1.msra.mxu0 %v1636
      %1664 = vmatprep.subr.mxu0 0.0
      %1665 = vmatpush1.msra.mxu0 0.0
      %1666 = vmatprep.subr.mxu0 0.0
      %1667 = vmatpush1.msra.mxu0 0.0
      %1668 = vmatprep.subr.mxu0 0.0
      %1669 = vmatpush1.msra.mxu0 0.0
      %1670 = vmatprep.subr.mxu0 0.0
      %1671 = vmatpush1.msra.mxu0 0.0
      %1672 = vmatprep.subr.mxu0 0.0
      %1673 = vmatpush1.msra.mxu0 0.0
      %1674 = vmatprep.subr.mxu0 0.0
      %1675 = vmatpush1.msra.mxu0 0.0
      %1676 = vmatprep.subr.mxu0 0.0
      %1677 = vmatpush1.msra.mxu0 0.0
      %1678 = vmatprep.subr.mxu0 0.0
      %1679 = vmatpush1.msra.mxu0 0.0
      %1680 = vmatprep.subr.mxu0 0.0
      %1681 = vmatpush1.msra.mxu0 0.0
      %1682 = vmatprep.subr.mxu0 0.0
      %1683 = vmatpush1.msra.mxu0 0.0
      %1684 = vmatprep.subr.mxu0 0.0
      %1685 = vmatpush1.msra.mxu0 0.0
      %1686 = vmatprep.subr.mxu0 0.0
      %1687 = vmatpush1.msra.mxu0 0.0
      %1688 = vmatprep.subr.mxu0 0.0
      %1689 = vmatpush1.msra.mxu0 0.0
      %1690 = vmatprep.subr.mxu0 0.0
      %1691 = vmatpush1.msra.mxu0 0.0
      %1692 = vmatprep.subr.mxu0 0.0
      %1693 = vmatpush1.msra.mxu0 0.0
      %1694 = vmatprep.subr.mxu0 0.0
      %1695 = vmatpush1.msra.mxu0 0.0
      %1696 = vmatprep.subr.mxu0 0.0
      %1697 = vmatpush1.msra.mxu0 0.0
      %1698 = vmatprep.subr.mxu0 0.0
      %1699 = vmatpush1.msra.mxu0 0.0
      %1700 = vmatprep.subr.mxu0 0.0
      %1701 = vmatpush1.msra.mxu0 0.0
      %1702 = vmatprep.subr.mxu0 0.0
      %1703 = vmatpush1.msra.mxu0 0.0
      %1704 = vmatprep.subr.mxu0 0.0
      %1705 = vmatpush1.msra.mxu0 0.0
      %1706 = vmatprep.subr.mxu0 0.0
      %1707 = vmatpush1.msra.mxu0 0.0
      %1708 = vmatprep.subr.mxu0 0.0
      %1709 = vmatpush1.msra.mxu0 0.0
      %1710 = vmatprep.subr.mxu0 0.0
      %1711 = vmatpush1.msra.mxu0 0.0
      %1712 = vmatprep.mubr.f32.mxu0 0.0
      %1713 = vmatmul.mubr.f32.gmra.mrb[0].mxu0 %v1646
      %v1714 = vpop.f32.mrb[0].mxu0
      %v1715 = vadd.f32 %v1643, %v1714
      %v1716 = vpop.f32.mrb[0].mxu0
      %v1717 = vadd.f32 %v1643, %v1716
      %1718 = vdwg.mxu0
      %1719 = vst [vmem:[%s704] sm:$0x7f] %v1715
      %1720 = vst [vmem:[%s704 + $0x8] sm:$0x7f] %v1717
      %v1721 = vld [vmem:[%s14] sm:$0x7]
      %v1722 = vld [vmem:[%s694] sm:$0xff]
      %v1723 = vld [vmem:[%s694 + $0x8] sm:$0xff]
      %v1724 = vld [vmem:[%s694 + $0x10] sm:$0xff]
      %v1725 = vld [vmem:[%s694 + $0x18] sm:$0xff]
      %v1726 = vld [vmem:[%s694 + $0x20] sm:$0xff]
      %v1727 = vld [vmem:[%s694 + $0x28] sm:$0xff]
      %v1728 = vld [vmem:[%s694 + $0x30] sm:$0xff]
      %v1729 = vld [vmem:[%s694 + $0x38] sm:$0xff]
      %v1730 = vld [vmem:[%s694 + $0x40] sm:$0xff]
      %v1731 = vld [vmem:[%s694 + $0x48] sm:$0xff]
      %v1732 = vld [vmem:[%s694 + $0x50] sm:$0xff]
      %v1733 = vld [vmem:[%s694 + $0x58] sm:$0xff]
      %v1734 = vld [vmem:[%s694 + $0x60] sm:$0xff]
      %v1735 = vld [vmem:[%s694 + $0x68] sm:$0xff]
      %v1736 = vld [vmem:[%s694 + $0x70] sm:$0xff]
      %v1737 = vld [vmem:[%s694 + $0x78] sm:$0xff]
      %v1738 = vld [vmem:[%s15] sm:$0x7]
      %1740 = vset.pattern.permute.xlu0 0
      %1741 = vperm.xlu0 %1740, %v1738
      %v1742 = vpop.permute.xlu0 %1741
      %v1745 = vsel %vm926, %v1721, 0
      %1747 = vmatprep.subr.mxu0 %v1723
      %1748 = vmatpush1.msra.mxu0 %v1722
      %1749 = vmatprep.subr.mxu0 %v1725
      %1750 = vmatpush1.msra.mxu0 %v1724
      %1751 = vmatprep.subr.mxu0 %v1727
      %1752 = vmatpush1.msra.mxu0 %v1726
      %1753 = vmatprep.subr.mxu0 %v1729
      %1754 = vmatpush1.msra.mxu0 %v1728
      %1755 = vmatprep.subr.mxu0 %v1731
      %1756 = vmatpush1.msra.mxu0 %v1730
      %1757 = vmatprep.subr.mxu0 %v1733
      %1758 = vmatpush1.msra.mxu0 %v1732
      %1759 = vmatprep.subr.mxu0 %v1735
      %1760 = vmatpush1.msra.mxu0 %v1734
      %1761 = vmatprep.subr.mxu0 %v1737
      %1762 = vmatpush1.msra.mxu0 %v1736
      %1763 = vmatprep.subr.mxu0 0.0
      %1764 = vmatpush1.msra.mxu0 0.0
      %1765 = vmatprep.subr.mxu0 0.0
      %1766 = vmatpush1.msra.mxu0 0.0
      %1767 = vmatprep.subr.mxu0 0.0
      %1768 = vmatpush1.msra.mxu0 0.0
      %1769 = vmatprep.subr.mxu0 0.0
      %1770 = vmatpush1.msra.mxu0 0.0
      %1771 = vmatprep.subr.mxu0 0.0
      %1772 = vmatpush1.msra.mxu0 0.0
      %1773 = vmatprep.subr.mxu0 0.0
      %1774 = vmatpush1.msra.mxu0 0.0
      %1775 = vmatprep.subr.mxu0 0.0
      %1776 = vmatpush1.msra.mxu0 0.0
      %1777 = vmatprep.subr.mxu0 0.0
      %1778 = vmatpush1.msra.mxu0 0.0
      %1779 = vmatprep.subr.mxu0 0.0
      %1780 = vmatpush1.msra.mxu0 0.0
      %1781 = vmatprep.subr.mxu0 0.0
      %1782 = vmatpush1.msra.mxu0 0.0
      %1783 = vmatprep.subr.mxu0 0.0
      %1784 = vmatpush1.msra.mxu0 0.0
      %1785 = vmatprep.subr.mxu0 0.0
      %1786 = vmatpush1.msra.mxu0 0.0
      %1787 = vmatprep.subr.mxu0 0.0
      %1788 = vmatpush1.msra.mxu0 0.0
      %1789 = vmatprep.subr.mxu0 0.0
      %1790 = vmatpush1.msra.mxu0 0.0
      %1791 = vmatprep.subr.mxu0 0.0
      %1792 = vmatpush1.msra.mxu0 0.0
      %1793 = vmatprep.subr.mxu0 0.0
      %1794 = vmatpush1.msra.mxu0 0.0
      %1795 = vmatprep.subr.mxu0 0.0
      %1796 = vmatpush1.msra.mxu0 0.0
      %1797 = vmatprep.subr.mxu0 0.0
      %1798 = vmatpush1.msra.mxu0 0.0
      %1799 = vmatprep.subr.mxu0 0.0
      %1800 = vmatpush1.msra.mxu0 0.0
      %1801 = vmatprep.subr.mxu0 0.0
      %1802 = vmatpush1.msra.mxu0 0.0
      %1803 = vmatprep.subr.mxu0 0.0
      %1804 = vmatpush1.msra.mxu0 0.0
      %1805 = vmatprep.subr.mxu0 0.0
      %1806 = vmatpush1.msra.mxu0 0.0
      %1807 = vmatprep.subr.mxu0 0.0
      %1808 = vmatpush1.msra.mxu0 0.0
      %1809 = vmatprep.subr.mxu0 0.0
      %1810 = vmatpush1.msra.mxu0 0.0
      %1811 = vmatprep.mubr.f32.mxu0 0.0
      %1812 = vmatmul.mubr.f32.gmra.mrb[0].mxu0 %v1745
      %v1813 = vpop.f32.mrb[0].mxu0
      %v1814 = vadd.f32 %v1742, %v1813
      %v1815 = vpop.f32.mrb[0].mxu0
      %v1816 = vadd.f32 %v1742, %v1815
      %1817 = vdwg.mxu0
      %v1820 = vcombine.low %v1814, %v1816
      %1822 = vst [vmem:[%s709] sm:$0x77] %v1820
      %v1823 = vld [vmem:[%s16] sm:$0x3]
      %v1824 = vld [vmem:[%s699] sm:$0xff]
      %v1825 = vld [vmem:[%s699 + $0x8] sm:$0xff]
      %v1826 = vld [vmem:[%s699 + $0x10] sm:$0xff]
      %v1827 = vld [vmem:[%s699 + $0x18] sm:$0xff]
      %v1828 = vld [vmem:[%s699 + $0x20] sm:$0xff]
      %v1829 = vld [vmem:[%s699 + $0x28] sm:$0xff]
      %v1830 = vld [vmem:[%s699 + $0x30] sm:$0xff]
      %v1831 = vld [vmem:[%s699 + $0x38] sm:$0xff]
      %v1832 = vld [vmem:[%s699 + $0x40] sm:$0xff]
      %v1833 = vld [vmem:[%s699 + $0x48] sm:$0xff]
      %v1834 = vld [vmem:[%s699 + $0x50] sm:$0xff]
      %v1835 = vld [vmem:[%s699 + $0x58] sm:$0xff]
      %v1836 = vld [vmem:[%s699 + $0x60] sm:$0xff]
      %v1837 = vld [vmem:[%s699 + $0x68] sm:$0xff]
      %v1838 = vld [vmem:[%s699 + $0x70] sm:$0xff]
      %v1839 = vld [vmem:[%s699 + $0x78] sm:$0xff]
      %v1840 = vld [vmem:[%s17] sm:$0x3]
      %1842 = vset.pattern.permute.xlu0 0
      %1843 = vperm.xlu0 %1842, %v1840
      %v1844 = vpop.permute.xlu0 %1843
      %v1847 = vsel %vm926, %v1823, 0
      %1849 = vmatprep.subr.mxu0 %v1825
      %1850 = vmatpush1.msra.mxu0 %v1824
      %1851 = vmatprep.subr.mxu0 %v1827
      %1852 = vmatpush1.msra.mxu0 %v1826
      %1853 = vmatprep.subr.mxu0 %v1829
      %1854 = vmatpush1.msra.mxu0 %v1828
      %1855 = vmatprep.subr.mxu0 %v1831
      %1856 = vmatpush1.msra.mxu0 %v1830
      %1857 = vmatprep.subr.mxu0 %v1833
      %1858 = vmatpush1.msra.mxu0 %v1832
      %1859 = vmatprep.subr.mxu0 %v1835
      %1860 = vmatpush1.msra.mxu0 %v1834
      %1861 = vmatprep.subr.mxu0 %v1837
      %1862 = vmatpush1.msra.mxu0 %v1836
      %1863 = vmatprep.subr.mxu0 %v1839
      %1864 = vmatpush1.msra.mxu0 %v1838
      %1865 = vmatprep.subr.mxu0 0.0
      %1866 = vmatpush1.msra.mxu0 0.0
      %1867 = vmatprep.subr.mxu0 0.0
      %1868 = vmatpush1.msra.mxu0 0.0
      %1869 = vmatprep.subr.mxu0 0.0
      %1870 = vmatpush1.msra.mxu0 0.0
      %1871 = vmatprep.subr.mxu0 0.0
      %1872 = vmatpush1.msra.mxu0 0.0
      %1873 = vmatprep.subr.mxu0 0.0
      %1874 = vmatpush1.msra.mxu0 0.0
      %1875 = vmatprep.subr.mxu0 0.0
      %1876 = vmatpush1.msra.mxu0 0.0
      %1877 = vmatprep.subr.mxu0 0.0
      %1878 = vmatpush1.msra.mxu0 0.0
      %1879 = vmatprep.subr.mxu0 0.0
      %1880 = vmatpush1.msra.mxu0 0.0
      %1881 = vmatprep.subr.mxu0 0.0
      %1882 = vmatpush1.msra.mxu0 0.0
      %1883 = vmatprep.subr.mxu0 0.0
      %1884 = vmatpush1.msra.mxu0 0.0
      %1885 = vmatprep.subr.mxu0 0.0
      %1886 = vmatpush1.msra.mxu0 0.0
      %1887 = vmatprep.subr.mxu0 0.0
      %1888 = vmatpush1.msra.mxu0 0.0
      %1889 = vmatprep.subr.mxu0 0.0
      %1890 = vmatpush1.msra.mxu0 0.0
      %1891 = vmatprep.subr.mxu0 0.0
      %1892 = vmatpush1.msra.mxu0 0.0
      %1893 = vmatprep.subr.mxu0 0.0
      %1894 = vmatpush1.msra.mxu0 0.0
      %1895 = vmatprep.subr.mxu0 0.0
      %1896 = vmatpush1.msra.mxu0 0.0
      %1897 = vmatprep.subr.mxu0 0.0
      %1898 = vmatpush1.msra.mxu0 0.0
      %1899 = vmatprep.subr.mxu0 0.0
      %1900 = vmatpush1.msra.mxu0 0.0
      %1901 = vmatprep.subr.mxu0 0.0
      %1902 = vmatpush1.msra.mxu0 0.0
      %1903 = vmatprep.subr.mxu0 0.0
      %1904 = vmatpush1.msra.mxu0 0.0
      %1905 = vmatprep.subr.mxu0 0.0
      %1906 = vmatpush1.msra.mxu0 0.0
      %1907 = vmatprep.subr.mxu0 0.0
      %1908 = vmatpush1.msra.mxu0 0.0
      %1909 = vmatprep.subr.mxu0 0.0
      %1910 = vmatpush1.msra.mxu0 0.0
      %1911 = vmatprep.subr.mxu0 0.0
      %1912 = vmatpush1.msra.mxu0 0.0
      %1913 = vmatprep.mubr.f32.mxu0 0.0
      %1914 = vmatmul.mubr.f32.gmra.mrb[0].mxu0 %v1847
      %v1915 = vpop.f32.mrb[0].mxu0
      %v1916 = vadd.f32 %v1844, %v1915
      %v1917 = vpop.f32.mrb[0].mxu0
      %v1918 = vadd.f32 %v1844, %v1917
      %1919 = vdwg.mxu0
      %v1922 = vcombine.low %v1916, %v1918
      %v1924 = vunpack.c.l.s4 1983009808
      %v1925 = vunpack.c.0.s8 %v1924
      %v1926 = vlaneseq
      %v1927 = vshrl.u32 %v1926, 7
      %v1928 = vsub.s32 %v1925, %v1927
      %v1929 = vrot.slane %v1922, %v1928
      %1931 = vst [vmem:[%s714] sm:$0xf] %v1929
      %p1932 = scmp.lt.s32.totalorder %s32, 1
      %s1933 = scalar_select %p1932, %s32, 1
      %s1934 = smul.addr %s1933, 2
      %s1935 = smul.addr %s1934, 8
      %s1936 = scalar_lea.vmem %s18, %s1935
      %p1937 = scmp.lt.s32.totalorder %s32, 1
      %s1938 = scalar_select %p1937, %s32, 1
      %s1939 = smul.addr %s1938, 2
      %s1940 = smul.addr %s1939, 4
      %s1941 = scalar_lea.vmem %s19, %s1940
      %p1942 = scmp.lt.s32.totalorder %s32, 1
      %s1943 = scalar_select %p1942, %s32, 1
      %s1944 = smul.addr %s1943, 2
      %s1945 = smul.addr %s1944, 2
      %s1946 = scalar_lea.vmem %s20, %s1945
      // Predicated region
      $region93: #{final_classifier_forward.1} parent=91 // pred_check
        %p1947 = pneg %p448
      $region94: #{final_classifier_forward.1} parent=91 // pred_check_branch
        %1949 = sbr.rel (%p1947) target = $region96
      $region95: #{final_classifier_forward.1} parent=91 // pred_region
        _
      $region96: #{final_classifier_forward.1} parent=91 // pred_fallthru
        _
      // Predicated region
      $region97: #{final_classifier_forward.1} parent=91 // pred_check
        %p1950 = pneg %p474
      $region98: #{final_classifier_forward.1} parent=91 // pred_check_branch
        %1952 = sbr.rel (%p1950) target = $region100
      $region99: #{final_classifier_forward.1} parent=91 // pred_region
        _
      $region100: #{final_classifier_forward.1} parent=91 // pred_fallthru
        _
      // Predicated region
      $region101: #{final_classifier_forward.1} parent=91 // pred_check
        %p1953 = pneg %p500
      $region102: #{final_classifier_forward.1} parent=91 // pred_check_branch
        %1955 = sbr.rel (%p1953) target = $region104
      $region103: #{final_classifier_forward.1} parent=91 // pred_region
        _
      $region104: #{final_classifier_forward.1} parent=91 // pred_fallthru
        _
    $region92: #{final_classifier_forward.1} parent=5 // pred_fallthru
      _
    %p1956 = scmp.le.s32.totalorder 2, %s27
    // Predicated region
    $region105: #{final_classifier_forward.1} parent=5 // pred_check
      %p1957 = pneg %p1956
    $region106: #{final_classifier_forward.1} parent=5 // pred_check_branch
      %1959 = sbr.rel (%p1957) target = $region108
    $region107: #{final_classifier_forward.1} parent=5 // pred_region
      %s1960 = ssub.s32 %s27, 2
      // Predicated region
      $region109: #{final_classifier_forward.1} parent=107 // pred_check
        %p1961 = pneg %p454
      $region110: #{final_classifier_forward.1} parent=107 // pred_check_branch
        %1963 = sbr.rel (%p1961) target = $region112
      $region111: #{final_classifier_forward.1} parent=107 // pred_region
        %p1964 = scmp.lt.s32.totalorder %s33, 1
        %s1965 = scalar_select %p1964, %s33, 1
        %s1966 = smul.addr %s1965, 2
        %s1967 = smul.addr %s1966, 8
        %s1968 = scalar_lea.vmem %s18, %s1967
      $region112: #{final_classifier_forward.1} parent=107 // pred_fallthru
        _
      // Predicated region
      $region113: #{final_classifier_forward.1} parent=107 // pred_check
        %p1969 = pneg %p480
      $region114: #{final_classifier_forward.1} parent=107 // pred_check_branch
        %1971 = sbr.rel (%p1969) target = $region116
      $region115: #{final_classifier_forward.1} parent=107 // pred_region
        %p1972 = scmp.lt.s32.totalorder %s33, 1
        %s1973 = scalar_select %p1972, %s33, 1
        %s1974 = smul.addr %s1973, 2
        %s1975 = smul.addr %s1974, 4
        %s1976 = scalar_lea.vmem %s19, %s1975
      $region116: #{final_classifier_forward.1} parent=107 // pred_fallthru
        _
      // Predicated region
      $region117: #{final_classifier_forward.1} parent=107 // pred_check
        %p1977 = pneg %p506
      $region118: #{final_classifier_forward.1} parent=107 // pred_check_branch
        %1979 = sbr.rel (%p1977) target = $region120
      $region119: #{final_classifier_forward.1} parent=107 // pred_region
        %p1980 = scmp.lt.s32.totalorder %s33, 1
        %s1981 = scalar_select %p1980, %s33, 1
        %s1982 = smul.addr %s1981, 2
        %s1983 = smul.addr %s1982, 2
        %s1984 = scalar_lea.vmem %s20, %s1983
      $region120: #{final_classifier_forward.1} parent=107 // pred_fallthru
        _
    $region108: #{final_classifier_forward.1} parent=5 // pred_fallthru
      _
  $region6: #{final_classifier_forward.1} parent=0 // loop_footer
    %s31 = sadd.s32 1, %s27
  $region7: #{final_classifier_forward.1} parent=0 // loop_footer_branch
    %26 = sbr.rel target = $region3
  $region8: #{final_classifier_forward.1} parent=0 // loop_exit
    _

</llo_original>
